<compile_context>
chip_gen: v6e
topology: v6e:2x2x1
jax: 0.10.0
libtpu: 0.0.40
codegen_flags: <defaults>
</compile_context>

<pallas_src>
import math
from functools import partial

import jax
import jax.numpy as jnp
from jax.experimental import pallas as pl
from jax.experimental.pallas import tpu as pltpu

_INV_SQRT2 = 1.0 / math.sqrt(2.0)


# ---------------------------------------------------------------------------
# Fused Pallas kernel:
#   y = scale[:, None] * (conv1d_same(x, W) + bias[:, None]) [+ residual]
# One grid step = one batch row.  'same' padding is done in-kernel while
# building the im2col operand in VMEM scratch; the conv is a single MXU matmul.
# ---------------------------------------------------------------------------
def _build_im2col(x, xim_ref, K, pad_l):
    """Write K zero-padded shifted copies of x (Ci, L) into xim_ref (K*Ci, L).

    Row block k of xim holds x shifted by (k - pad_l) with zeros where the
    'same'-padded input would be zero, i.e. xim[k*Ci:(k+1)*Ci, t] = xpad[:, t+k].
    All offsets are static Python ints -> static slices, no host-side padding.
    """
    Ci, L = x.shape
    for k in range(K):
        s = k - pad_l
        rows = pl.ds(k * Ci, Ci)
        if s == 0:
            xim_ref[rows, :] = x
        elif s < 0:
            p = -s
            xim_ref[rows, pl.ds(0, p)] = jnp.zeros((Ci, p), jnp.float32)
            xim_ref[rows, pl.ds(p, L - p)] = x[:, :L - p]
        else:
            xim_ref[rows, pl.ds(0, L - s)] = x[:, s:]
            xim_ref[rows, pl.ds(L - s, s)] = jnp.zeros((Ci, s), jnp.float32)


def _conv1d_scale_kernel(x_ref, w_ref, s_ref, b_ref, o_ref, xim_ref, *, K, pad_l):
    # x_ref: (1, Ci, L)  unpadded input row         w_ref: (Co, K*Ci) lane-dense
    # s_ref/b_ref: (Co, 1)                          o_ref: (1, Co, L)
    # xim_ref: (K*Ci, L) VMEM scratch (im2col operand, rebuilt every step)
    x = x_ref[0].astype(jnp.float32)
    _build_im2col(x, xim_ref, K, pad_l)
    acc = jnp.dot(w_ref[...], xim_ref[...],            # single MXU matmul
                  preferred_element_type=jnp.float32)
    y = s_ref[...] * (acc + b_ref[...])                # fused scale/bias (VPU)
    o_ref[0] = y.astype(o_ref.dtype)


def _conv1d_scale_residual_kernel(x_ref, w_ref, s_ref, b_ref, r_ref, o_ref,
                                  xim_ref, *, K, pad_l):
    # Same as above, plus a fused residual add (r_ref: (1, Co, L)).
    x = x_ref[0].astype(jnp.float32)
    _build_im2col(x, xim_ref, K, pad_l)
    acc = jnp.dot(w_ref[...], xim_ref[...],
                  preferred_element_type=jnp.float32)
    y = s_ref[...] * (acc + b_ref[...]) + r_ref[0].astype(jnp.float32)
    o_ref[0] = y.astype(o_ref.dtype)


def conv1d_same_scale(x, w, scale, bias=None, residual=None):
    """scale[:,None] * conv1d(x, w, bias, stride=1, padding='same') [+ residual]."""
    N, Ci, L = x.shape
    Co, Ci2, K = w.shape
    assert Ci == Ci2
    pad_l = (K - 1) // 2

    # Lane-dense tap-major weight: column index = k*Ci + c (matches im2col rows).
    w2d = jnp.transpose(w, (0, 2, 1)).reshape(Co, K * Ci).astype(jnp.float32)
    s2 = scale.reshape(Co, 1).astype(jnp.float32)
    if bias is None:
        b2 = jnp.zeros((Co, 1), jnp.float32)
    else:
        b2 = bias.reshape(Co, 1).astype(jnp.float32)

    x_spec = pl.BlockSpec((1, Ci, L), lambda n: (n, 0, 0))
    w_spec = pl.BlockSpec((Co, K * Ci), lambda n: (0, 0))   # constant -> DMA'd once
    s_spec = pl.BlockSpec((Co, 1), lambda n: (0, 0))         # constant -> DMA'd once
    b_spec = pl.BlockSpec((Co, 1), lambda n: (0, 0))         # constant -> DMA'd once
    out_spec = pl.BlockSpec((1, Co, L), lambda n: (n, 0, 0))

    if residual is None:
        kern = partial(_conv1d_scale_kernel, K=K, pad_l=pad_l)
        in_specs = [x_spec, w_spec, s_spec, b_spec]
        args = (x, w2d, s2, b2)
    else:
        kern = partial(_conv1d_scale_residual_kernel, K=K, pad_l=pad_l)
        in_specs = [x_spec, w_spec, s_spec, b_spec,
                    pl.BlockSpec((1, Co, L), lambda n: (n, 0, 0))]
        args = (x, w2d, s2, b2, residual.astype(x.dtype))

    return pl.pallas_call(
        kern,
        out_shape=jax.ShapeDtypeStruct((N, Co, L), x.dtype),
        grid_spec=pltpu.PrefetchScalarGridSpec(
            num_scalar_prefetch=0,
            grid=(N,),                       # one batch row per grid step
            in_specs=in_specs,
            out_specs=out_spec,
            scratch_shapes=[pltpu.VMEM((K * Ci, L), jnp.float32)],
        ),
        compiler_params=pltpu.CompilerParams(
            dimension_semantics=("parallel",),   # shard batch over both TCs on v7x
        ),
    )(*args)


# ---------------------------------------------------------------------------
# Haar (db1) wavelet transform / inverse — even/odd interleave glue (XLA).
# ---------------------------------------------------------------------------
def haar_dwt(x):
    # wavelet_transform_1d with db1 filters (stride-2 grouped conv, pad 0):
    #   lo[t] = (x[2t] + x[2t+1]) / sqrt(2);  hi[t] = (x[2t] - x[2t+1]) / sqrt(2)
    xe = x[:, :, 0::2]
    xo = x[:, :, 1::2]
    lo = (xe + xo) * _INV_SQRT2
    hi = (xe - xo) * _INV_SQRT2
    return jnp.stack([lo, hi], axis=2)                  # (N, C, 2, L//2)


def haar_idwt(x4):
    # inverse_wavelet_transform_1d with db1 filters (conv_transpose1d, stride 2):
    #   out[2t] = (lo[t] - hi[t]) / sqrt(2);  out[2t+1] = (lo[t] + hi[t]) / sqrt(2)
    lo = x4[:, :, 0, :]
    hi = x4[:, :, 1, :]
    even = (lo - hi) * _INV_SQRT2
    odd = (lo + hi) * _INV_SQRT2
    n, c, lh = lo.shape
    return jnp.stack([even, odd], axis=-1).reshape(n, c, 2 * lh)


# ---------------------------------------------------------------------------
# WTConv1d forward (Pallas-backed).
# ---------------------------------------------------------------------------
@partial(jax.jit, static_argnames=("wt_levels", "stride"))
def wtconv1d_forward(x, base_w, base_b, base_scale, wave_ws, wave_scales,
                     *, wt_levels, stride):
    x_ll_levels, x_h_levels, shapes = [], [], []
    curr_x_ll = x
    for i in range(wt_levels):
        curr_shape = curr_x_ll.shape
        shapes.append(curr_shape)
        if curr_shape[2] % 2 > 0:
            curr_x_ll = jnp.pad(curr_x_ll, ((0, 0), (0, 0), (0, curr_shape[2] % 2)))
        curr_x = haar_dwt(curr_x_ll)                    # (N, C, 2, L/2)
        curr_x_ll = curr_x[:, :, 0, :]
        b, c, _, lh = curr_x.shape
        tag = curr_x.reshape(b, c * 2, lh)
        # fused: wavelet_scale[i](wavelet_convs[i](tag)), bias=False
        tag = conv1d_same_scale(tag, wave_ws[i], wave_scales[i], bias=None)
        tag = tag.reshape(b, c, 2, lh)
        x_ll_levels.append(tag[:, :, 0, :])
        x_h_levels.append(tag[:, :, 1, :])

    next_x_ll = 0.0
    for i in range(wt_levels - 1, -1, -1):
        curr_x_ll = x_ll_levels.pop() + next_x_ll
        curr_x_h = x_h_levels.pop()
        curr_shape = shapes.pop()
        curr = jnp.stack([curr_x_ll, curr_x_h], axis=2)
        next_x_ll = haar_idwt(curr)[:, :, :curr_shape[2]]
    x_tag = next_x_ll

    # fused: base_scale(base_conv(x)) + x_tag  (residual folded into the epilogue)
    out = conv1d_same_scale(x, base_w, base_scale, bias=base_b, residual=x_tag)
    if stride > 1:
        # do_stride: depthwise 1-tap ones conv with stride == plain subsampling
        # TODO(synk): fold the stride into the output index_map instead.
        out = out[:, :, ::stride]
    return out


# ---------------------------------------------------------------------------
# Pure-JAX reference (no Pallas) for correctness checking.
# ---------------------------------------------------------------------------
def _conv1d_same_ref(x, w, bias):
    N, Ci, L = x.shape
    Co, _, K = w.shape
    pad_l = (K - 1) // 2
    xp = jnp.pad(x, ((0, 0), (0, 0), (pad_l, K - 1 - pad_l)))
    acc = jnp.zeros((N, Co, L), jnp.float32)
    for k in range(K):
        acc = acc + jnp.einsum("oi,nil->nol", w[:, :, k], xp[:, :, k:k + L],
                               precision=jax.lax.Precision.HIGHEST)
    if bias is not None:
        acc = acc + bias[None, :, None]
    return acc


def wtconv1d_reference(x, base_w, base_b, base_scale, wave_ws, wave_scales,
                       wt_levels, stride):
    x_ll_levels, x_h_levels, shapes = [], [], []
    curr_x_ll = x
    for i in range(wt_levels):
        curr_shape = curr_x_ll.shape
        shapes.append(curr_shape)
        if curr_shape[2] % 2 > 0:
            curr_x_ll = jnp.pad(curr_x_ll, ((0, 0), (0, 0), (0, curr_shape[2] % 2)))
        curr_x = haar_dwt(curr_x_ll)
        curr_x_ll = curr_x[:, :, 0, :]
        b, c, _, lh = curr_x.shape
        tag = curr_x.reshape(b, c * 2, lh)
        tag = wave_scales[i][None, :, None] * _conv1d_same_ref(tag, wave_ws[i], None)
        tag = tag.reshape(b, c, 2, lh)
        x_ll_levels.append(tag[:, :, 0, :])
        x_h_levels.append(tag[:, :, 1, :])

    next_x_ll = 0.0
    for i in range(wt_levels - 1, -1, -1):
        curr_x_ll = x_ll_levels.pop() + next_x_ll
        curr_x_h = x_h_levels.pop()
        curr_shape = shapes.pop()
        curr = jnp.stack([curr_x_ll, curr_x_h], axis=2)
        next_x_ll = haar_idwt(curr)[:, :, :curr_shape[2]]
    x_tag = next_x_ll

    out = base_scale[None, :, None] * _conv1d_same_ref(x, base_w, base_b) + x_tag
    if stride > 1:
        out = out[:, :, ::stride]
    return out


if __name__ == "__main__":
    key = jax.random.PRNGKey(0)

    # Small shapes consistent with WTConv1d: (N, C, L), kernel_size=5, 2 WT levels.
    N, C, L, K, wt_levels, stride = 2, 8, 64, 5, 2, 1

    keys = jax.random.split(key, 3 + wt_levels)
    kx, kb, kbb = keys[0], keys[1], keys[2]
    wave_keys = keys[3:]

    # Deterministic parameter init (conv weights random, scales match the module's
    # _ScaleModule init: 1.0 for base_scale, 0.1 for wavelet_scale).
    fan_base = 1.0 / math.sqrt(C * K)
    base_w = jax.random.uniform(kb, (C, C, K), jnp.float32, -fan_base, fan_base)
    base_b = jax.random.uniform(kbb, (C,), jnp.float32, -fan_base, fan_base)
    base_scale = jnp.ones((C,), jnp.float32)

    fan_wave = 1.0 / math.sqrt(2 * C * K)
    wave_ws = tuple(
        jax.random.uniform(wave_keys[i], (2 * C, 2 * C, K), jnp.float32,
                           -fan_wave, fan_wave)
        for i in range(wt_levels))
    wave_scales = tuple(jnp.full((2 * C,), 0.1, jnp.float32) for _ in range(wt_levels))

    x = jax.random.normal(kx, (N, C, L), dtype=jnp.float32)

    out = wtconv1d_forward(x, base_w, base_b, base_scale, wave_ws, wave_scales,
                           wt_levels=wt_levels, stride=stride)
    out = jax.block_until_ready(out)

    ref = wtconv1d_reference(x, base_w, base_b, base_scale, wave_ws, wave_scales,
                             wt_levels, stride)

    assert out.shape == ref.shape == (N, C, L)
    assert jnp.allclose(out, ref, atol=2e-4, rtol=2e-4), \
        float(jnp.max(jnp.abs(out - ref)))

    print("KERNEL_OK")
</pallas_src>

<mosaic_0001>
module attributes {stable_mosaic.version = 11 : i64} {
  func.func @_conv1d_scale_kernel(%arg0: i32, %arg1: memref<1x16x16xf32, #tpu.memory_space<vmem>>, %arg2: memref<16x80xf32, #tpu.memory_space<vmem>>, %arg3: memref<16x1xf32, #tpu.memory_space<vmem>>, %arg4: memref<16x1xf32, #tpu.memory_space<vmem>>, %arg5: memref<1x16x16xf32, #tpu.memory_space<vmem>>, %arg6: memref<80x16xf32, #tpu.memory_space<vmem>>) attributes {dimension_semantics = [#tpu.dimension_semantics<parallel>], iteration_bounds = array<i64: 2>, scalar_prefetch = 0 : i64, scratch_operands = 1 : i64, tpu.core_type = #tpu.core_type<tc>, window_params = [{transform_indices = @transform_0, window_bounds = array<i64: 1, 16, 16>}, {pipeline_mode = #tpu.pipeline_mode<synchronous>, transform_indices = @transform_1, window_bounds = array<i64: 16, 80>}, {pipeline_mode = #tpu.pipeline_mode<synchronous>, transform_indices = @transform_2, window_bounds = array<i64: 16, 1>}, {pipeline_mode = #tpu.pipeline_mode<synchronous>, transform_indices = @transform_3, window_bounds = array<i64: 16, 1>}, {transform_indices = @transform_4, window_bounds = array<i64: 1, 16, 16>}]} {
    %c0 = arith.constant 0 : index
    %c0_0 = arith.constant 0 : index
    %c0_1 = arith.constant 0 : index
    %0 = vector.load %arg1[%c0, %c0_0, %c0_1] : memref<1x16x16xf32, #tpu.memory_space<vmem>>, vector<1x16x16xf32>
    %1 = vector.shape_cast %0 : vector<1x16x16xf32> to vector<16x16xf32>
    %cst = arith.constant 0.000000e+00 : f32
    %2 = vector.broadcast %cst : f32 to vector<16x2xf32>
    %c0_2 = arith.constant 0 : index
    %c0_3 = arith.constant 0 : index
    %3 = vector.load %arg6[%c0_2, %c0_3] : memref<80x16xf32, #tpu.memory_space<vmem>>, vector<16x2xf32>
    tpu.vector_store %arg6[%c0_2, %c0_3], %2 {strides = array<i32>} : memref<80x16xf32, #tpu.memory_space<vmem>>, vector<16x2xf32>,
    %4 = vector.extract_strided_slice %1 {offsets = [0, 0], sizes = [16, 14], strides = [1, 1]} : vector<16x16xf32> to vector<16x14xf32>
    %c0_4 = arith.constant 0 : index
    %c2 = arith.constant 2 : index
    %5 = vector.load %arg6[%c0_4, %c2] : memref<80x16xf32, #tpu.memory_space<vmem>>, vector<16x14xf32>
    tpu.vector_store %arg6[%c0_4, %c2], %4 {strides = array<i32>} : memref<80x16xf32, #tpu.memory_space<vmem>>, vector<16x14xf32>,
    %cst_5 = arith.constant 0.000000e+00 : f32
    %6 = vector.broadcast %cst_5 : f32 to vector<16x1xf32>
    %c16 = arith.constant 16 : index
    %c0_6 = arith.constant 0 : index
    %7 = vector.load %arg6[%c16, %c0_6] : memref<80x16xf32, #tpu.memory_space<vmem>>, vector<16x1xf32>
    tpu.vector_store %arg6[%c16, %c0_6], %6 {strides = array<i32>} : memref<80x16xf32, #tpu.memory_space<vmem>>, vector<16x1xf32>,
    %8 = vector.extract_strided_slice %1 {offsets = [0, 0], sizes = [16, 15], strides = [1, 1]} : vector<16x16xf32> to vector<16x15xf32>
    %c16_7 = arith.constant 16 : index
    %c1 = arith.constant 1 : index
    %9 = vector.load %arg6[%c16_7, %c1] : memref<80x16xf32, #tpu.memory_space<vmem>>, vector<16x15xf32>
    tpu.vector_store %arg6[%c16_7, %c1], %8 {strides = array<i32>} : memref<80x16xf32, #tpu.memory_space<vmem>>, vector<16x15xf32>,
    %c32 = arith.constant 32 : index
    %c0_8 = arith.constant 0 : index
    %10 = vector.load %arg6[%c32, %c0_8] : memref<80x16xf32, #tpu.memory_space<vmem>>, vector<16x16xf32>
    tpu.vector_store %arg6[%c32, %c0_8], %1 {strides = array<i32>} : memref<80x16xf32, #tpu.memory_space<vmem>>, vector<16x16xf32>,
    %11 = vector.extract_strided_slice %1 {offsets = [0, 1], sizes = [16, 15], strides = [1, 1]} : vector<16x16xf32> to vector<16x15xf32>
    %c48 = arith.constant 48 : index
    %c0_9 = arith.constant 0 : index
    %12 = vector.load %arg6[%c48, %c0_9] : memref<80x16xf32, #tpu.memory_space<vmem>>, vector<16x15xf32>
    tpu.vector_store %arg6[%c48, %c0_9], %11 {strides = array<i32>} : memref<80x16xf32, #tpu.memory_space<vmem>>, vector<16x15xf32>,
    %cst_10 = arith.constant 0.000000e+00 : f32
    %13 = vector.broadcast %cst_10 : f32 to vector<16x1xf32>
    %c48_11 = arith.constant 48 : index
    %c15 = arith.constant 15 : index
    %14 = vector.load %arg6[%c48_11, %c15] : memref<80x16xf32, #tpu.memory_space<vmem>>, vector<16x1xf32>
    tpu.vector_store %arg6[%c48_11, %c15], %13 {strides = array<i32>} : memref<80x16xf32, #tpu.memory_space<vmem>>, vector<16x1xf32>,
    %15 = vector.extract_strided_slice %1 {offsets = [0, 2], sizes = [16, 14], strides = [1, 1]} : vector<16x16xf32> to vector<16x14xf32>
    %c64 = arith.constant 64 : index
    %c0_12 = arith.constant 0 : index
    %16 = vector.load %arg6[%c64, %c0_12] : memref<80x16xf32, #tpu.memory_space<vmem>>, vector<16x14xf32>
    tpu.vector_store %arg6[%c64, %c0_12], %15 {strides = array<i32>} : memref<80x16xf32, #tpu.memory_space<vmem>>, vector<16x14xf32>,
    %cst_13 = arith.constant 0.000000e+00 : f32
    %17 = vector.broadcast %cst_13 : f32 to vector<16x2xf32>
    %c64_14 = arith.constant 64 : index
    %c14 = arith.constant 14 : index
    %18 = vector.load %arg6[%c64_14, %c14] : memref<80x16xf32, #tpu.memory_space<vmem>>, vector<16x2xf32>
    tpu.vector_store %arg6[%c64_14, %c14], %17 {strides = array<i32>} : memref<80x16xf32, #tpu.memory_space<vmem>>, vector<16x2xf32>,
    %c0_15 = arith.constant 0 : index
    %c0_16 = arith.constant 0 : index
    %19 = vector.load %arg2[%c0_15, %c0_16] : memref<16x80xf32, #tpu.memory_space<vmem>>, vector<16x80xf32>
    %c0_17 = arith.constant 0 : index
    %c0_18 = arith.constant 0 : index
    %20 = vector.load %arg6[%c0_17, %c0_18] : memref<80x16xf32, #tpu.memory_space<vmem>>, vector<80x16xf32>
    %cst_19 = arith.constant dense<0.000000e+00> : vector<16x16xf32>
    %21 = tpu.matmul %19, %20, %cst_19 {dimension_numbers = #tpu.dot_dimension_numbers<[1], [0], [0], [1], [0, 0, 1, 1], [], []>} : vector<16x80xf32>, vector<80x16xf32>, vector<16x16xf32> -> vector<16x16xf32>
    %c0_20 = arith.constant 0 : index
    %c0_21 = arith.constant 0 : index
    %22 = vector.load %arg3[%c0_20, %c0_21] : memref<16x1xf32, #tpu.memory_space<vmem>>, vector<16x1xf32>
    %c0_22 = arith.constant 0 : index
    %c0_23 = arith.constant 0 : index
    %23 = vector.load %arg4[%c0_22, %c0_23] : memref<16x1xf32, #tpu.memory_space<vmem>>, vector<16x1xf32>
    %24 = vector.broadcast %23 : vector<16x1xf32> to vector<16x16xf32>
    %25 = arith.addf %21, %24 : vector<16x16xf32>
    %26 = vector.broadcast %22 : vector<16x1xf32> to vector<16x16xf32>
    %27 = arith.mulf %26, %25 : vector<16x16xf32>
    %c0_24 = arith.constant 0 : index
    %c0_25 = arith.constant 0 : index
    %c0_26 = arith.constant 0 : index
    %28 = vector.load %arg5[%c0_24, %c0_25, %c0_26] : memref<1x16x16xf32, #tpu.memory_space<vmem>>, vector<1x16x16xf32>
    %29 = vector.shape_cast %28 : vector<1x16x16xf32> to vector<16x16xf32>
    %30 = vector.shape_cast %27 : vector<16x16xf32> to vector<1x16x16xf32>
    tpu.vector_store %arg5[%c0_24, %c0_25, %c0_26], %30 {strides = array<i32>} : memref<1x16x16xf32, #tpu.memory_space<vmem>>, vector<1x16x16xf32>,
    return
  }
  func.func @transform_0(%arg0: i32) -> (i32, i32, i32) {
    %c0_i32 = arith.constant 0 : i32
    %c0_i32_0 = arith.constant 0 : i32
    %c0_i32_1 = arith.constant 0 : i32
    return %arg0, %c0_i32, %c0_i32_0 : i32, i32, i32
  }
  func.func @transform_1(%arg0: i32) -> (i32, i32) {
    %c0_i32 = arith.constant 0 : i32
    %c0_i32_0 = arith.constant 0 : i32
    %c0_i32_1 = arith.constant 0 : i32
    return %c0_i32, %c0_i32_0 : i32, i32
  }
  func.func @transform_2(%arg0: i32) -> (i32, i32) {
    %c0_i32 = arith.constant 0 : i32
    %c0_i32_0 = arith.constant 0 : i32
    %c0_i32_1 = arith.constant 0 : i32
    return %c0_i32, %c0_i32_0 : i32, i32
  }
  func.func @transform_3(%arg0: i32) -> (i32, i32) {
    %c0_i32 = arith.constant 0 : i32
    %c0_i32_0 = arith.constant 0 : i32
    %c0_i32_1 = arith.constant 0 : i32
    return %c0_i32, %c0_i32_0 : i32, i32
  }
  func.func @transform_4(%arg0: i32) -> (i32, i32, i32) {
    %c0_i32 = arith.constant 0 : i32
    %c0_i32_0 = arith.constant 0 : i32
    %c0_i32_1 = arith.constant 0 : i32
    return %arg0, %c0_i32, %c0_i32_0 : i32, i32, i32
  }
}

module attributes {stable_mosaic.version = 11 : i64} {
  func.func @_conv1d_scale_kernel(%arg0: i32, %arg1: memref<1x16x32xf32, #tpu.memory_space<vmem>>, %arg2: memref<16x80xf32, #tpu.memory_space<vmem>>, %arg3: memref<16x1xf32, #tpu.memory_space<vmem>>, %arg4: memref<16x1xf32, #tpu.memory_space<vmem>>, %arg5: memref<1x16x32xf32, #tpu.memory_space<vmem>>, %arg6: memref<80x32xf32, #tpu.memory_space<vmem>>) attributes {dimension_semantics = [#tpu.dimension_semantics<parallel>], iteration_bounds = array<i64: 2>, scalar_prefetch = 0 : i64, scratch_operands = 1 : i64, tpu.core_type = #tpu.core_type<tc>, window_params = [{transform_indices = @transform_0, window_bounds = array<i64: 1, 16, 32>}, {pipeline_mode = #tpu.pipeline_mode<synchronous>, transform_indices = @transform_1, window_bounds = array<i64: 16, 80>}, {pipeline_mode = #tpu.pipeline_mode<synchronous>, transform_indices = @transform_2, window_bounds = array<i64: 16, 1>}, {pipeline_mode = #tpu.pipeline_mode<synchronous>, transform_indices = @transform_3, window_bounds = array<i64: 16, 1>}, {transform_indices = @transform_4, window_bounds = array<i64: 1, 16, 32>}]} {
    %c0 = arith.constant 0 : index
    %c0_0 = arith.constant 0 : index
    %c0_1 = arith.constant 0 : index
    %0 = vector.load %arg1[%c0, %c0_0, %c0_1] : memref<1x16x32xf32, #tpu.memory_space<vmem>>, vector<1x16x32xf32>
    %1 = vector.shape_cast %0 : vector<1x16x32xf32> to vector<16x32xf32>
    %cst = arith.constant 0.000000e+00 : f32
    %2 = vector.broadcast %cst : f32 to vector<16x2xf32>
    %c0_2 = arith.constant 0 : index
    %c0_3 = arith.constant 0 : index
    %3 = vector.load %arg6[%c0_2, %c0_3] : memref<80x32xf32, #tpu.memory_space<vmem>>, vector<16x2xf32>
    tpu.vector_store %arg6[%c0_2, %c0_3], %2 {strides = array<i32>} : memref<80x32xf32, #tpu.memory_space<vmem>>, vector<16x2xf32>,
    %4 = vector.extract_strided_slice %1 {offsets = [0, 0], sizes = [16, 30], strides = [1, 1]} : vector<16x32xf32> to vector<16x30xf32>
    %c0_4 = arith.constant 0 : index
    %c2 = arith.constant 2 : index
    %5 = vector.load %arg6[%c0_4, %c2] : memref<80x32xf32, #tpu.memory_space<vmem>>, vector<16x30xf32>
    tpu.vector_store %arg6[%c0_4, %c2], %4 {strides = array<i32>} : memref<80x32xf32, #tpu.memory_space<vmem>>, vector<16x30xf32>,
    %cst_5 = arith.constant 0.000000e+00 : f32
    %6 = vector.broadcast %cst_5 : f32 to vector<16x1xf32>
    %c16 = arith.constant 16 : index
    %c0_6 = arith.constant 0 : index
    %7 = vector.load %arg6[%c16, %c0_6] : memref<80x32xf32, #tpu.memory_space<vmem>>, vector<16x1xf32>
    tpu.vector_store %arg6[%c16, %c0_6], %6 {strides = array<i32>} : memref<80x32xf32, #tpu.memory_space<vmem>>, vector<16x1xf32>,
    %8 = vector.extract_strided_slice %1 {offsets = [0, 0], sizes = [16, 31], strides = [1, 1]} : vector<16x32xf32> to vector<16x31xf32>
    %c16_7 = arith.constant 16 : index
    %c1 = arith.constant 1 : index
    %9 = vector.load %arg6[%c16_7, %c1] : memref<80x32xf32, #tpu.memory_space<vmem>>, vector<16x31xf32>
    tpu.vector_store %arg6[%c16_7, %c1], %8 {strides = array<i32>} : memref<80x32xf32, #tpu.memory_space<vmem>>, vector<16x31xf32>,
    %c32 = arith.constant 32 : index
    %c0_8 = arith.constant 0 : index
    %10 = vector.load %arg6[%c32, %c0_8] : memref<80x32xf32, #tpu.memory_space<vmem>>, vector<16x32xf32>
    tpu.vector_store %arg6[%c32, %c0_8], %1 {strides = array<i32>} : memref<80x32xf32, #tpu.memory_space<vmem>>, vector<16x32xf32>,
    %11 = vector.extract_strided_slice %1 {offsets = [0, 1], sizes = [16, 31], strides = [1, 1]} : vector<16x32xf32> to vector<16x31xf32>
    %c48 = arith.constant 48 : index
    %c0_9 = arith.constant 0 : index
    %12 = vector.load %arg6[%c48, %c0_9] : memref<80x32xf32, #tpu.memory_space<vmem>>, vector<16x31xf32>
    tpu.vector_store %arg6[%c48, %c0_9], %11 {strides = array<i32>} : memref<80x32xf32, #tpu.memory_space<vmem>>, vector<16x31xf32>,
    %cst_10 = arith.constant 0.000000e+00 : f32
    %13 = vector.broadcast %cst_10 : f32 to vector<16x1xf32>
    %c48_11 = arith.constant 48 : index
    %c31 = arith.constant 31 : index
    %14 = vector.load %arg6[%c48_11, %c31] : memref<80x32xf32, #tpu.memory_space<vmem>>, vector<16x1xf32>
    tpu.vector_store %arg6[%c48_11, %c31], %13 {strides = array<i32>} : memref<80x32xf32, #tpu.memory_space<vmem>>, vector<16x1xf32>,
    %15 = vector.extract_strided_slice %1 {offsets = [0, 2], sizes = [16, 30], strides = [1, 1]} : vector<16x32xf32> to vector<16x30xf32>
    %c64 = arith.constant 64 : index
    %c0_12 = arith.constant 0 : index
    %16 = vector.load %arg6[%c64, %c0_12] : memref<80x32xf32, #tpu.memory_space<vmem>>, vector<16x30xf32>
    tpu.vector_store %arg6[%c64, %c0_12], %15 {strides = array<i32>} : memref<80x32xf32, #tpu.memory_space<vmem>>, vector<16x30xf32>,
    %cst_13 = arith.constant 0.000000e+00 : f32
    %17 = vector.broadcast %cst_13 : f32 to vector<16x2xf32>
    %c64_14 = arith.constant 64 : index
    %c30 = arith.constant 30 : index
    %18 = vector.load %arg6[%c64_14, %c30] : memref<80x32xf32, #tpu.memory_space<vmem>>, vector<16x2xf32>
    tpu.vector_store %arg6[%c64_14, %c30], %17 {strides = array<i32>} : memref<80x32xf32, #tpu.memory_space<vmem>>, vector<16x2xf32>,
    %c0_15 = arith.constant 0 : index
    %c0_16 = arith.constant 0 : index
    %19 = vector.load %arg2[%c0_15, %c0_16] : memref<16x80xf32, #tpu.memory_space<vmem>>, vector<16x80xf32>
    %c0_17 = arith.constant 0 : index
    %c0_18 = arith.constant 0 : index
    %20 = vector.load %arg6[%c0_17, %c0_18] : memref<80x32xf32, #tpu.memory_space<vmem>>, vector<80x32xf32>
    %cst_19 = arith.constant dense<0.000000e+00> : vector<16x32xf32>
    %21 = tpu.matmul %19, %20, %cst_19 {dimension_numbers = #tpu.dot_dimension_numbers<[1], [0], [0], [1], [0, 0, 1, 1], [], []>} : vector<16x80xf32>, vector<80x32xf32>, vector<16x32xf32> -> vector<16x32xf32>
    %c0_20 = arith.constant 0 : index
    %c0_21 = arith.constant 0 : index
    %22 = vector.load %arg3[%c0_20, %c0_21] : memref<16x1xf32, #tpu.memory_space<vmem>>, vector<16x1xf32>
    %c0_22 = arith.constant 0 : index
    %c0_23 = arith.constant 0 : index
    %23 = vector.load %arg4[%c0_22, %c0_23] : memref<16x1xf32, #tpu.memory_space<vmem>>, vector<16x1xf32>
    %24 = vector.broadcast %23 : vector<16x1xf32> to vector<16x32xf32>
    %25 = arith.addf %21, %24 : vector<16x32xf32>
    %26 = vector.broadcast %22 : vector<16x1xf32> to vector<16x32xf32>
    %27 = arith.mulf %26, %25 : vector<16x32xf32>
    %c0_24 = arith.constant 0 : index
    %c0_25 = arith.constant 0 : index
    %c0_26 = arith.constant 0 : index
    %28 = vector.load %arg5[%c0_24, %c0_25, %c0_26] : memref<1x16x32xf32, #tpu.memory_space<vmem>>, vector<1x16x32xf32>
    %29 = vector.shape_cast %28 : vector<1x16x32xf32> to vector<16x32xf32>
    %30 = vector.shape_cast %27 : vector<16x32xf32> to vector<1x16x32xf32>
    tpu.vector_store %arg5[%c0_24, %c0_25, %c0_26], %30 {strides = array<i32>} : memref<1x16x32xf32, #tpu.memory_space<vmem>>, vector<1x16x32xf32>,
    return
  }
  func.func @transform_0(%arg0: i32) -> (i32, i32, i32) {
    %c0_i32 = arith.constant 0 : i32
    %c0_i32_0 = arith.constant 0 : i32
    %c0_i32_1 = arith.constant 0 : i32
    return %arg0, %c0_i32, %c0_i32_0 : i32, i32, i32
  }
  func.func @transform_1(%arg0: i32) -> (i32, i32) {
    %c0_i32 = arith.constant 0 : i32
    %c0_i32_0 = arith.constant 0 : i32
    %c0_i32_1 = arith.constant 0 : i32
    return %c0_i32, %c0_i32_0 : i32, i32
  }
  func.func @transform_2(%arg0: i32) -> (i32, i32) {
    %c0_i32 = arith.constant 0 : i32
    %c0_i32_0 = arith.constant 0 : i32
    %c0_i32_1 = arith.constant 0 : i32
    return %c0_i32, %c0_i32_0 : i32, i32
  }
  func.func @transform_3(%arg0: i32) -> (i32, i32) {
    %c0_i32 = arith.constant 0 : i32
    %c0_i32_0 = arith.constant 0 : i32
    %c0_i32_1 = arith.constant 0 : i32
    return %c0_i32, %c0_i32_0 : i32, i32
  }
  func.func @transform_4(%arg0: i32) -> (i32, i32, i32) {
    %c0_i32 = arith.constant 0 : i32
    %c0_i32_0 = arith.constant 0 : i32
    %c0_i32_1 = arith.constant 0 : i32
    return %arg0, %c0_i32, %c0_i32_0 : i32, i32, i32
  }
}

module attributes {stable_mosaic.version = 11 : i64} {
  func.func @_conv1d_scale_residual_kernel(%arg0: i32, %arg1: memref<1x8x64xf32, #tpu.memory_space<vmem>>, %arg2: memref<8x40xf32, #tpu.memory_space<vmem>>, %arg3: memref<8x1xf32, #tpu.memory_space<vmem>>, %arg4: memref<8x1xf32, #tpu.memory_space<vmem>>, %arg5: memref<1x8x64xf32, #tpu.memory_space<vmem>>, %arg6: memref<1x8x64xf32, #tpu.memory_space<vmem>>, %arg7: memref<40x64xf32, #tpu.memory_space<vmem>>) attributes {dimension_semantics = [#tpu.dimension_semantics<parallel>], iteration_bounds = array<i64: 2>, scalar_prefetch = 0 : i64, scratch_operands = 1 : i64, tpu.core_type = #tpu.core_type<tc>, window_params = [{transform_indices = @transform_0, window_bounds = array<i64: 1, 8, 64>}, {pipeline_mode = #tpu.pipeline_mode<synchronous>, transform_indices = @transform_1, window_bounds = array<i64: 8, 40>}, {pipeline_mode = #tpu.pipeline_mode<synchronous>, transform_indices = @transform_2, window_bounds = array<i64: 8, 1>}, {pipeline_mode = #tpu.pipeline_mode<synchronous>, transform_indices = @transform_3, window_bounds = array<i64: 8, 1>}, {transform_indices = @transform_4, window_bounds = array<i64: 1, 8, 64>}, {transform_indices = @transform_5, window_bounds = array<i64: 1, 8, 64>}]} {
    %c0 = arith.constant 0 : index
    %c0_0 = arith.constant 0 : index
    %c0_1 = arith.constant 0 : index
    %0 = vector.load %arg1[%c0, %c0_0, %c0_1] : memref<1x8x64xf32, #tpu.memory_space<vmem>>, vector<1x8x64xf32>
    %1 = vector.shape_cast %0 : vector<1x8x64xf32> to vector<8x64xf32>
    %cst = arith.constant 0.000000e+00 : f32
    %2 = vector.broadcast %cst : f32 to vector<8x2xf32>
    %c0_2 = arith.constant 0 : index
    %c0_3 = arith.constant 0 : index
    %3 = vector.load %arg7[%c0_2, %c0_3] : memref<40x64xf32, #tpu.memory_space<vmem>>, vector<8x2xf32>
    tpu.vector_store %arg7[%c0_2, %c0_3], %2 {strides = array<i32>} : memref<40x64xf32, #tpu.memory_space<vmem>>, vector<8x2xf32>,
    %4 = vector.extract_strided_slice %1 {offsets = [0, 0], sizes = [8, 62], strides = [1, 1]} : vector<8x64xf32> to vector<8x62xf32>
    %c0_4 = arith.constant 0 : index
    %c2 = arith.constant 2 : index
    %5 = vector.load %arg7[%c0_4, %c2] : memref<40x64xf32, #tpu.memory_space<vmem>>, vector<8x62xf32>
    tpu.vector_store %arg7[%c0_4, %c2], %4 {strides = array<i32>} : memref<40x64xf32, #tpu.memory_space<vmem>>, vector<8x62xf32>,
    %cst_5 = arith.constant 0.000000e+00 : f32
    %6 = vector.broadcast %cst_5 : f32 to vector<8x1xf32>
    %c8 = arith.constant 8 : index
    %c0_6 = arith.constant 0 : index
    %7 = vector.load %arg7[%c8, %c0_6] : memref<40x64xf32, #tpu.memory_space<vmem>>, vector<8x1xf32>
    tpu.vector_store %arg7[%c8, %c0_6], %6 {strides = array<i32>} : memref<40x64xf32, #tpu.memory_space<vmem>>, vector<8x1xf32>,
    %8 = vector.extract_strided_slice %1 {offsets = [0, 0], sizes = [8, 63], strides = [1, 1]} : vector<8x64xf32> to vector<8x63xf32>
    %c8_7 = arith.constant 8 : index
    %c1 = arith.constant 1 : index
    %9 = vector.load %arg7[%c8_7, %c1] : memref<40x64xf32, #tpu.memory_space<vmem>>, vector<8x63xf32>
    tpu.vector_store %arg7[%c8_7, %c1], %8 {strides = array<i32>} : memref<40x64xf32, #tpu.memory_space<vmem>>, vector<8x63xf32>,
    %c16 = arith.constant 16 : index
    %c0_8 = arith.constant 0 : index
    %10 = vector.load %arg7[%c16, %c0_8] : memref<40x64xf32, #tpu.memory_space<vmem>>, vector<8x64xf32>
    tpu.vector_store %arg7[%c16, %c0_8], %1 {strides = array<i32>} : memref<40x64xf32, #tpu.memory_space<vmem>>, vector<8x64xf32>,
    %11 = vector.extract_strided_slice %1 {offsets = [0, 1], sizes = [8, 63], strides = [1, 1]} : vector<8x64xf32> to vector<8x63xf32>
    %c24 = arith.constant 24 : index
    %c0_9 = arith.constant 0 : index
    %12 = vector.load %arg7[%c24, %c0_9] : memref<40x64xf32, #tpu.memory_space<vmem>>, vector<8x63xf32>
    tpu.vector_store %arg7[%c24, %c0_9], %11 {strides = array<i32>} : memref<40x64xf32, #tpu.memory_space<vmem>>, vector<8x63xf32>,
    %cst_10 = arith.constant 0.000000e+00 : f32
    %13 = vector.broadcast %cst_10 : f32 to vector<8x1xf32>
    %c24_11 = arith.constant 24 : index
    %c63 = arith.constant 63 : index
    %14 = vector.load %arg7[%c24_11, %c63] : memref<40x64xf32, #tpu.memory_space<vmem>>, vector<8x1xf32>
    tpu.vector_store %arg7[%c24_11, %c63], %13 {strides = array<i32>} : memref<40x64xf32, #tpu.memory_space<vmem>>, vector<8x1xf32>,
    %15 = vector.extract_strided_slice %1 {offsets = [0, 2], sizes = [8, 62], strides = [1, 1]} : vector<8x64xf32> to vector<8x62xf32>
    %c32 = arith.constant 32 : index
    %c0_12 = arith.constant 0 : index
    %16 = vector.load %arg7[%c32, %c0_12] : memref<40x64xf32, #tpu.memory_space<vmem>>, vector<8x62xf32>
    tpu.vector_store %arg7[%c32, %c0_12], %15 {strides = array<i32>} : memref<40x64xf32, #tpu.memory_space<vmem>>, vector<8x62xf32>,
    %cst_13 = arith.constant 0.000000e+00 : f32
    %17 = vector.broadcast %cst_13 : f32 to vector<8x2xf32>
    %c32_14 = arith.constant 32 : index
    %c62 = arith.constant 62 : index
    %18 = vector.load %arg7[%c32_14, %c62] : memref<40x64xf32, #tpu.memory_space<vmem>>, vector<8x2xf32>
    tpu.vector_store %arg7[%c32_14, %c62], %17 {strides = array<i32>} : memref<40x64xf32, #tpu.memory_space<vmem>>, vector<8x2xf32>,
    %c0_15 = arith.constant 0 : index
    %c0_16 = arith.constant 0 : index
    %19 = vector.load %arg2[%c0_15, %c0_16] : memref<8x40xf32, #tpu.memory_space<vmem>>, vector<8x40xf32>
    %c0_17 = arith.constant 0 : index
    %c0_18 = arith.constant 0 : index
    %20 = vector.load %arg7[%c0_17, %c0_18] : memref<40x64xf32, #tpu.memory_space<vmem>>, vector<40x64xf32>
    %cst_19 = arith.constant dense<0.000000e+00> : vector<8x64xf32>
    %21 = tpu.matmul %19, %20, %cst_19 {dimension_numbers = #tpu.dot_dimension_numbers<[1], [0], [0], [1], [0, 0, 1, 1], [], []>} : vector<8x40xf32>, vector<40x64xf32>, vector<8x64xf32> -> vector<8x64xf32>
    %c0_20 = arith.constant 0 : index
    %c0_21 = arith.constant 0 : index
    %22 = vector.load %arg3[%c0_20, %c0_21] : memref<8x1xf32, #tpu.memory_space<vmem>>, vector<8x1xf32>
    %c0_22 = arith.constant 0 : index
    %c0_23 = arith.constant 0 : index
    %23 = vector.load %arg4[%c0_22, %c0_23] : memref<8x1xf32, #tpu.memory_space<vmem>>, vector<8x1xf32>
    %24 = vector.broadcast %23 : vector<8x1xf32> to vector<8x64xf32>
    %25 = arith.addf %21, %24 : vector<8x64xf32>
    %26 = vector.broadcast %22 : vector<8x1xf32> to vector<8x64xf32>
    %27 = arith.mulf %26, %25 : vector<8x64xf32>
    %c0_24 = arith.constant 0 : index
    %c0_25 = arith.constant 0 : index
    %c0_26 = arith.constant 0 : index
    %28 = vector.load %arg5[%c0_24, %c0_25, %c0_26] : memref<1x8x64xf32, #tpu.memory_space<vmem>>, vector<1x8x64xf32>
    %29 = vector.shape_cast %28 : vector<1x8x64xf32> to vector<8x64xf32>
    %30 = arith.addf %27, %29 : vector<8x64xf32>
    %c0_27 = arith.constant 0 : index
    %c0_28 = arith.constant 0 : index
    %c0_29 = arith.constant 0 : index
    %31 = vector.load %arg6[%c0_27, %c0_28, %c0_29] : memref<1x8x64xf32, #tpu.memory_space<vmem>>, vector<1x8x64xf32>
    %32 = vector.shape_cast %31 : vector<1x8x64xf32> to vector<8x64xf32>
    %33 = vector.shape_cast %30 : vector<8x64xf32> to vector<1x8x64xf32>
    tpu.vector_store %arg6[%c0_27, %c0_28, %c0_29], %33 {strides = array<i32>} : memref<1x8x64xf32, #tpu.memory_space<vmem>>, vector<1x8x64xf32>,
    return
  }
  func.func @transform_0(%arg0: i32) -> (i32, i32, i32) {
    %c0_i32 = arith.constant 0 : i32
    %c0_i32_0 = arith.constant 0 : i32
    %c0_i32_1 = arith.constant 0 : i32
    return %arg0, %c0_i32, %c0_i32_0 : i32, i32, i32
  }
  func.func @transform_1(%arg0: i32) -> (i32, i32) {
    %c0_i32 = arith.constant 0 : i32
    %c0_i32_0 = arith.constant 0 : i32
    %c0_i32_1 = arith.constant 0 : i32
    return %c0_i32, %c0_i32_0 : i32, i32
  }
  func.func @transform_2(%arg0: i32) -> (i32, i32) {
    %c0_i32 = arith.constant 0 : i32
    %c0_i32_0 = arith.constant 0 : i32
    %c0_i32_1 = arith.constant 0 : i32
    return %c0_i32, %c0_i32_0 : i32, i32
  }
  func.func @transform_3(%arg0: i32) -> (i32, i32) {
    %c0_i32 = arith.constant 0 : i32
    %c0_i32_0 = arith.constant 0 : i32
    %c0_i32_1 = arith.constant 0 : i32
    return %c0_i32, %c0_i32_0 : i32, i32
  }
  func.func @transform_4(%arg0: i32) -> (i32, i32, i32) {
    %c0_i32 = arith.constant 0 : i32
    %c0_i32_0 = arith.constant 0 : i32
    %c0_i32_1 = arith.constant 0 : i32
    return %arg0, %c0_i32, %c0_i32_0 : i32, i32, i32
  }
  func.func @transform_5(%arg0: i32) -> (i32, i32, i32) {
    %c0_i32 = arith.constant 0 : i32
    %c0_i32_0 = arith.constant 0 : i32
    %c0_i32_1 = arith.constant 0 : i32
    return %arg0, %c0_i32, %c0_i32_0 : i32, i32, i32
  }
}

</mosaic_0001>

<llo_original>
// kernel: wtconv1d_forward.4
$region0: #{wtconv1d_forward.4}
  #allocation0 [shape = 'u32[]', space=smem, size = 0x4, offset = 0x4, fixed_abs, tag = 'smem constant byte address 0x4 - core index']
  #allocation1 [shape = 'u32[144,128]{1,0:T(1,128)}', space=vmem, size = 0x12000, scoped, tag = 'internal scratch']
  #allocation2 [shape = 'f32[80,16]{1,0:T(8,128)}', space=vmem, size = 0xa000, scoped, tag = 'scratch operand']
  %s0 = inlined_call_operand.vmem [shape: f32[2,16,16], index: 0, kind: input, shape index: {}]
  %s1 = inlined_call_operand.vmem [shape: f32[16,80], index: 1, kind: input, shape index: {}]
  %s2 = inlined_call_operand.vmem [shape: f32[16,1], index: 2, kind: input, shape index: {}]
  %s3 = inlined_call_operand.vmem [shape: f32[16,1], index: 3, kind: input, shape index: {}]
  %s4 = inlined_call_operand.vmem [shape: f32[2,16,16], index: 4, kind: output, shape index: {}]
  %s5 = sld [smem:[#allocation0]]
  $region49: #{wtconv1d_forward.4} parent=0
    _
  %s7 = ssub.s32 1, %s5
  %s8 = scalar_select 0, %s7, %s5
  loop: start=0, step=1, limit=4
  $region2: #{wtconv1d_forward.4} parent=0 // loop_pre_header
    _
  $region3: #{wtconv1d_forward.4} parent=0 // loop_header
    %s10 = sphi 0, %s14
    %p11 = scmp.ge.s32.totalorder %s10, 4
    %s20 = sphi 0, %s22
    %s23 = sphi 0, %s20
    %s24 = sphi 0, %s23
    %s40 = sphi 0, %s24
    %s44 = sphi 0, %s44
    %s46 = sphi 0, %s44
    %s47 = sphi 0, %s46
    %s61 = sphi 0, %s47
    %s65 = sphi 0, %s65
    %s67 = sphi 0, %s65
    %s68 = sphi 0, %s67
    %s82 = sphi 0, %s68
    %s86 = sphi 0, %s86
    %s88 = sphi 0, %s86
    %s89 = sphi 0, %s88
    %s103 = sphi 0, %s89
    %s109 = sphi 0, %s111
    %s112 = sphi 0, %s109
    %s113 = sphi 0, %s112
    %s129 = sphi 0, %s113
  $region4: #{wtconv1d_forward.4} parent=0 // loop_header_branch
    %13 = sbr.rel (%p11) target = $region8
  $region5: #{wtconv1d_forward.4} parent=0 // loop_body
    %s15 = ssub.s32 %s10, 1
    %s16 = ssub.s32 %s10, 2
    %s17 = sadd.s32 %s10, 1
    %s18 = ssub.s32 %s10, %s17
    %p19 = scmp.eq.s32.totalorder %s18, 0
    %s21 = sadd.s32 %s20, 1
    %s22 = scalar_select %p19, %s20, %s21
    %p25 = pneg %p19
    %p26 = scmp.eq.s32.totalorder %s10, 1
    %p27 = por %p25, %p26
    %p28 = scmp.ne.s32.totalorder %s20, %s23
    %p29 = scmp.eq.s32.totalorder %s10, 0
    %p30 = por %p28, %p29
    %p31 = scmp.ne.s32.totalorder %s20, %s23
    %p32 = scmp.eq.s32.totalorder %s15, 1
    %p33 = por %p31, %p32
    %p34 = scmp.ne.s32.totalorder %s23, %s24
    %p35 = scmp.eq.s32.totalorder %s15, 0
    %p36 = por %p34, %p35
    %p37 = scmp.ne.s32.totalorder %s23, %s24
    %p38 = scmp.eq.s32.totalorder %s16, 1
    %p39 = por %p37, %p38
    %p41 = scmp.ne.s32.totalorder %s24, %s40
    %p42 = scmp.eq.s32.totalorder %s16, 0
    %p43 = por %p41, %p42
    %s45 = sadd.s32 %s44, 1
    %p48 = scmp.eq.s32.totalorder %s10, 1
    %p49 = scmp.ne.s32.totalorder %s44, %s46
    %p50 = scmp.eq.s32.totalorder %s10, 0
    %p51 = por %p49, %p50
    %p52 = scmp.ne.s32.totalorder %s44, %s46
    %p53 = scmp.eq.s32.totalorder %s15, 1
    %p54 = por %p52, %p53
    %p55 = scmp.ne.s32.totalorder %s46, %s47
    %p56 = scmp.eq.s32.totalorder %s15, 0
    %p57 = por %p55, %p56
    %p58 = scmp.ne.s32.totalorder %s46, %s47
    %p59 = scmp.eq.s32.totalorder %s16, 1
    %p60 = por %p58, %p59
    %p62 = scmp.ne.s32.totalorder %s47, %s61
    %p63 = scmp.eq.s32.totalorder %s16, 0
    %p64 = por %p62, %p63
    %s66 = sadd.s32 %s65, 1
    %p69 = scmp.eq.s32.totalorder %s10, 1
    %p70 = scmp.ne.s32.totalorder %s65, %s67
    %p71 = scmp.eq.s32.totalorder %s10, 0
    %p72 = por %p70, %p71
    %p73 = scmp.ne.s32.totalorder %s65, %s67
    %p74 = scmp.eq.s32.totalorder %s15, 1
    %p75 = por %p73, %p74
    %p76 = scmp.ne.s32.totalorder %s67, %s68
    %p77 = scmp.eq.s32.totalorder %s15, 0
    %p78 = por %p76, %p77
    %p79 = scmp.ne.s32.totalorder %s67, %s68
    %p80 = scmp.eq.s32.totalorder %s16, 1
    %p81 = por %p79, %p80
    %p83 = scmp.ne.s32.totalorder %s68, %s82
    %p84 = scmp.eq.s32.totalorder %s16, 0
    %p85 = por %p83, %p84
    %s87 = sadd.s32 %s86, 1
    %p90 = scmp.eq.s32.totalorder %s10, 1
    %p91 = scmp.ne.s32.totalorder %s86, %s88
    %p92 = scmp.eq.s32.totalorder %s10, 0
    %p93 = por %p91, %p92
    %p94 = scmp.ne.s32.totalorder %s86, %s88
    %p95 = scmp.eq.s32.totalorder %s15, 1
    %p96 = por %p94, %p95
    %p97 = scmp.ne.s32.totalorder %s88, %s89
    %p98 = scmp.eq.s32.totalorder %s15, 0
    %p99 = por %p97, %p98
    %p100 = scmp.ne.s32.totalorder %s88, %s89
    %p101 = scmp.eq.s32.totalorder %s16, 1
    %p102 = por %p100, %p101
    %p104 = scmp.ne.s32.totalorder %s89, %s103
    %p105 = scmp.eq.s32.totalorder %s16, 0
    %p106 = por %p104, %p105
    %s107 = ssub.s32 %s10, %s17
    %p108 = scmp.eq.s32.totalorder %s107, 0
    %s110 = sadd.s32 %s109, 1
    %s111 = scalar_select %p108, %s109, %s110
    %p114 = pneg %p108
    %p115 = scmp.eq.s32.totalorder %s10, 1
    %p116 = por %p114, %p115
    %p117 = scmp.ne.s32.totalorder %s109, %s112
    %p118 = scmp.eq.s32.totalorder %s10, 0
    %p119 = por %p117, %p118
    %p120 = scmp.ne.s32.totalorder %s109, %s112
    %p121 = scmp.eq.s32.totalorder %s15, 1
    %p122 = por %p120, %p121
    %p123 = scmp.ne.s32.totalorder %s112, %s113
    %p124 = scmp.eq.s32.totalorder %s15, 0
    %p125 = por %p123, %p124
    %p126 = scmp.ne.s32.totalorder %s112, %s113
    %p127 = scmp.eq.s32.totalorder %s16, 1
    %p128 = por %p126, %p127
    %p130 = scmp.ne.s32.totalorder %s113, %s129
    %p131 = scmp.eq.s32.totalorder %s16, 0
    %p132 = por %p130, %p131
    %p133 = scmp.le.s32.totalorder 1, %s10
    %p134 = scmp.lt.s32.totalorder %s10, 3
    %p135 = pnand %p133, %p134
    %p136 = pneg %p135
    // Predicated region
    $region9: #{wtconv1d_forward.4} parent=5 // pred_check
      _
    $region10: #{wtconv1d_forward.4} parent=5 // pred_check_branch
      %138 = sbr.rel (%p135) target = $region12
    $region11: #{wtconv1d_forward.4} parent=5 // pred_region
      %s139 = ssub.s32 %s10, 1
      // Predicated region
      $region13: #{wtconv1d_forward.4} parent=11 // pred_check
        %p140 = pneg %p57
      $region14: #{wtconv1d_forward.4} parent=11 // pred_check_branch
        %142 = sbr.rel (%p140) target = $region16
      $region15: #{wtconv1d_forward.4} parent=11 // pred_region
        _
      $region16: #{wtconv1d_forward.4} parent=11 // pred_fallthru
        _
      // Predicated region
      $region17: #{wtconv1d_forward.4} parent=11 // pred_check
        %p143 = pneg %p78
      $region18: #{wtconv1d_forward.4} parent=11 // pred_check_branch
        %145 = sbr.rel (%p143) target = $region20
      $region19: #{wtconv1d_forward.4} parent=11 // pred_region
        _
      $region20: #{wtconv1d_forward.4} parent=11 // pred_fallthru
        _
      // Predicated region
      $region21: #{wtconv1d_forward.4} parent=11 // pred_check
        %p146 = pneg %p99
      $region22: #{wtconv1d_forward.4} parent=11 // pred_check_branch
        %148 = sbr.rel (%p146) target = $region24
      $region23: #{wtconv1d_forward.4} parent=11 // pred_region
        _
      $region24: #{wtconv1d_forward.4} parent=11 // pred_fallthru
        _
    $region12: #{wtconv1d_forward.4} parent=5 // pred_fallthru
      _
    %p149 = scmp.lt.s32.totalorder %s10, 2
    // Predicated region
    $region25: #{wtconv1d_forward.4} parent=5 // pred_check
      %p150 = pneg %p149
    $region26: #{wtconv1d_forward.4} parent=5 // pred_check_branch
      %152 = sbr.rel (%p150) target = $region28
    $region27: #{wtconv1d_forward.4} parent=5 // pred_region
      // Predicated region
      $region29: #{wtconv1d_forward.4} parent=27 // pred_check
        %p153 = pneg %p30
      $region30: #{wtconv1d_forward.4} parent=27 // pred_check_branch
        %155 = sbr.rel (%p153) target = $region32
      $region31: #{wtconv1d_forward.4} parent=27 // pred_region
        %p156 = scmp.lt.s32.totalorder %s10, 1
        %s157 = scalar_select %p156, %s10, 1
        %s158 = smul.addr %s157, 2
        %s159 = smul.addr %s158, 8
        %s160 = scalar_lea.vmem %s0, %s159
      $region32: #{wtconv1d_forward.4} parent=27 // pred_fallthru
        _
    $region28: #{wtconv1d_forward.4} parent=5 // pred_fallthru
      _
    %p161 = scmp.le.s32.totalorder 1, %s10
    %p162 = scmp.lt.s32.totalorder %s10, 3
    %p163 = pnand %p161, %p162
    %p164 = pneg %p163
    // Predicated region
    $region33: #{wtconv1d_forward.4} parent=5 // pred_check
      _
    $region34: #{wtconv1d_forward.4} parent=5 // pred_check_branch
      %166 = sbr.rel (%p163) target = $region36
    $region35: #{wtconv1d_forward.4} parent=5 // pred_region
      %s167 = ssub.s32 %s10, 1
      %p168 = scmp.lt.s32.totalorder %s15, 1
      %s169 = scalar_select %p168, %s15, 1
      %s170 = smul.addr %s169, 2
      %s171 = smul.addr %s170, 8
      %s172 = scalar_lea.vmem %s0, %s171
      %p173 = pneg %p36
      %p174 = pneg %p33
      %p175 = pneg %p57
      %p176 = pneg %p54
      %p177 = pneg %p78
      %p178 = pneg %p75
      %p179 = pneg %p99
      %p180 = pneg %p96
      %p181 = pneg %p125
      %p182 = pneg %p122
      %p183 = scmp.lt.s32.totalorder %s15, 1
      %s184 = scalar_select %p183, %s15, 1
      %s185 = smul.addr %s184, 2
      %s186 = smul.addr %s185, 8
      %s187 = scalar_lea.vmem %s4, %s186
      %p188 = scmp.lt.s32.totalorder %s15, 1
      %s189 = scalar_select %p188, %s15, 1
      %s190 = smul.addr %s189, 2
      %s191 = smul.addr %s190, 8
      %s192 = scalar_lea.vmem %s0, %s191
      %p193 = scmp.lt.s32.totalorder %s15, 1
      %s194 = scalar_select %p193, %s15, 1
      %s195 = smul.addr %s194, 2
      %s196 = smul.addr %s195, 8
      %s197 = scalar_lea.vmem %s4, %s196
      %v198 = vld [vmem:[%s192] sm:$0xff]
      %v199 = vld [vmem:[%s192 + $0x8] sm:$0xff]
      %vm200 = vcmask 15360
      %201 = vst.msk [vmem:[#allocation2] sm:$0xff] %vm200, 0.0
      %202 = vst.msk [vmem:[#allocation2 + $0x8] sm:$0xff] %vm200, 0.0
      %205 = vrot.lane.b32.xlu0 %v198, 2
      %v206 = vpop.permute.xlu0 %205
      %207 = vrot.lane.b32.xlu0 %v199, 2
      %v208 = vpop.permute.xlu0 %207
      %vm211 = vcmask 130064
      %212 = vst.msk [vmem:[#allocation2] sm:$0xff] %vm211, %v206
      %213 = vst.msk [vmem:[#allocation2 + $0x8] sm:$0xff] %vm211, %v208
      %vm214 = vcmask 7168
      %215 = vst.msk [vmem:[#allocation2 + $0x10] sm:$0xff] %vm214, 0.0
      %216 = vst.msk [vmem:[#allocation2 + $0x18] sm:$0xff] %vm214, 0.0
      %217 = vrot.lane.b32.xlu0 %v198, 1
      %v218 = vpop.permute.xlu0 %217
      %219 = vrot.lane.b32.xlu0 %v199, 1
      %v220 = vpop.permute.xlu0 %219
      %vm223 = vcmask 130056
      %224 = vst.msk [vmem:[#allocation2 + $0x10] sm:$0xff] %vm223, %v218
      %225 = vst.msk [vmem:[#allocation2 + $0x18] sm:$0xff] %vm223, %v220
      %vm226 = vcmask 130048
      %227 = vst.msk [vmem:[#allocation2 + $0x20] sm:$0xff] %vm226, %v198
      %228 = vst.msk [vmem:[#allocation2 + $0x28] sm:$0xff] %vm226, %v199
      %229 = vrot.lane.b32.xlu0 %v198, 127
      %v230 = vpop.permute.xlu0 %229
      %231 = vrot.lane.b32.xlu0 %v199, 127
      %v232 = vpop.permute.xlu0 %231
      %vm235 = vcmask 121856
      %236 = vst.msk [vmem:[#allocation2 + $0x30] sm:$0xff] %vm235, %v230
      %237 = vst.msk [vmem:[#allocation2 + $0x38] sm:$0xff] %vm235, %v232
      %vm238 = vcmask 130168
      %239 = vst.msk [vmem:[#allocation2 + $0x30] sm:$0xff] %vm238, 0.0
      %240 = vst.msk [vmem:[#allocation2 + $0x38] sm:$0xff] %vm238, 0.0
      %241 = vrot.lane.b32.xlu0 %v198, 126
      %v242 = vpop.permute.xlu0 %241
      %243 = vrot.lane.b32.xlu0 %v199, 126
      %v244 = vpop.permute.xlu0 %243
      %vm247 = vcmask 113664
      %248 = vst.msk [vmem:[#allocation2 + $0x40] sm:$0xff] %vm247, %v242
      %249 = vst.msk [vmem:[#allocation2 + $0x48] sm:$0xff] %vm247, %v244
      %vm250 = vcmask 130160
      %251 = vst.msk [vmem:[#allocation2 + $0x40] sm:$0xff] %vm250, 0.0
      %252 = vst.msk [vmem:[#allocation2 + $0x48] sm:$0xff] %vm250, 0.0
      %v253 = vld [vmem:[%s1] sm:$0xff]
      %v254 = vld [vmem:[%s1 + $0x8] sm:$0xff]
      %v255 = vld [vmem:[#allocation2] sm:$0xff]
      %v256 = vld [vmem:[#allocation2 + $0x8] sm:$0xff]
      %v257 = vld [vmem:[#allocation2 + $0x10] sm:$0xff]
      %v258 = vld [vmem:[#allocation2 + $0x18] sm:$0xff]
      %v259 = vld [vmem:[#allocation2 + $0x20] sm:$0xff]
      %v260 = vld [vmem:[#allocation2 + $0x28] sm:$0xff]
      %v261 = vld [vmem:[#allocation2 + $0x30] sm:$0xff]
      %v262 = vld [vmem:[#allocation2 + $0x38] sm:$0xff]
      %v263 = vld [vmem:[#allocation2 + $0x40] sm:$0xff]
      %v264 = vld [vmem:[#allocation2 + $0x48] sm:$0xff]
      %v265 = vld [vmem:[%s2] sm:$0xff]
      %v266 = vld [vmem:[%s2 + $0x8] sm:$0xff]
      %v267 = vld [vmem:[%s3] sm:$0xff]
      %v268 = vld [vmem:[%s3 + $0x8] sm:$0xff]
      %270 = vset.pattern.permute.xlu0 0
      %271 = vperm.xlu0 %270, %v267
      %v272 = vpop.permute.xlu0 %271
      %275 = vset.pattern.permute.xlu0 0
      %276 = vperm.xlu0 %275, %v268
      %v277 = vpop.permute.xlu0 %276
      %vm279 = vcmask 654336
      %v281 = vsel %vm279, %v253, 0
      %v284 = vsel %vm279, %v254, 0
      %286 = vmatprep.subr.mxu0 0.0
      %287 = vmatpush1.msra.mxu0 0.0
      %288 = vmatprep.subr.mxu0 0.0
      %289 = vmatpush1.msra.mxu0 0.0
      %290 = vmatprep.subr.mxu0 0.0
      %291 = vmatpush1.msra.mxu0 0.0
      %292 = vmatprep.subr.mxu0 0.0
      %293 = vmatpush1.msra.mxu0 0.0
      %294 = vmatprep.subr.mxu0 0.0
      %295 = vmatpush1.msra.mxu0 0.0
      %296 = vmatprep.subr.mxu0 0.0
      %297 = vmatpush1.msra.mxu0 0.0
      %298 = vmatprep.subr.mxu0 0.0
      %299 = vmatpush1.msra.mxu0 %v264
      %300 = vmatprep.subr.mxu0 0.0
      %301 = vmatpush1.msra.mxu0 %v263
      %302 = vmatprep.subr.mxu0 0.0
      %303 = vmatpush1.msra.mxu0 %v262
      %304 = vmatprep.subr.mxu0 0.0
      %305 = vmatpush1.msra.mxu0 %v261
      %306 = vmatprep.subr.mxu0 0.0
      %307 = vmatpush1.msra.mxu0 %v260
      %308 = vmatprep.subr.mxu0 0.0
      %309 = vmatpush1.msra.mxu0 %v259
      %310 = vmatprep.subr.mxu0 0.0
      %311 = vmatpush1.msra.mxu0 %v258
      %312 = vmatprep.subr.mxu0 0.0
      %313 = vmatpush1.msra.mxu0 %v257
      %314 = vmatprep.subr.mxu0 0.0
      %315 = vmatpush1.msra.mxu0 %v256
      %316 = vmatprep.subr.mxu0 0.0
      %317 = vmatpush1.msra.mxu0 %v255
      %318 = vmatprep.subr.mxu0 0.0
      %319 = vmatpush2.msra.mxu0 0.0
      %320 = vmatprep.subr.mxu0 0.0
      %321 = vmatpush2.msra.mxu0 0.0
      %322 = vmatprep.subr.mxu0 0.0
      %323 = vmatpush2.msra.mxu0 0.0
      %324 = vmatprep.subr.mxu0 0.0
      %325 = vmatpush2.msra.mxu0 0.0
      %326 = vmatprep.subr.mxu0 0.0
      %327 = vmatpush2.msra.mxu0 0.0
      %328 = vmatprep.subr.mxu0 0.0
      %329 = vmatpush2.msra.mxu0 0.0
      %330 = vmatprep.subr.mxu0 0.0
      %331 = vmatpush2.msra.mxu0 0.0
      %332 = vmatprep.subr.mxu0 0.0
      %333 = vmatpush2.msra.mxu0 0.0
      %334 = vmatprep.subr.mxu0 0.0
      %335 = vmatpush2.msra.mxu0 0.0
      %336 = vmatprep.subr.mxu0 0.0
      %337 = vmatpush2.msra.mxu0 0.0
      %338 = vmatprep.subr.mxu0 0.0
      %339 = vmatpush2.msra.mxu0 0.0
      %340 = vmatprep.subr.mxu0 0.0
      %341 = vmatpush2.msra.mxu0 0.0
      %342 = vmatprep.subr.mxu0 0.0
      %343 = vmatpush2.msra.mxu0 0.0
      %344 = vmatprep.subr.mxu0 0.0
      %345 = vmatpush2.msra.mxu0 0.0
      %346 = vmatprep.subr.mxu0 0.0
      %347 = vmatpush2.msra.mxu0 0.0
      %348 = vmatprep.subr.mxu0 0.0
      %349 = vmatpush2.msra.mxu0 0.0
      %350 = vmatprep.mubr.f32.mxu0 0.0
      %351 = vmatmul.mubr.f32.gmra.mxu0 %v281
      %v352 = vpop.f32.mrf.mxu0
      %v353 = vadd.f32 %v272, %v352
      %v354 = vpop.f32.mrf.mxu0
      %355 = vmatprep.mubr.f32.mxu0 0.0
      %356 = vmatmul.mubr.f32.gmra.mxu0 %v284
      %v357 = vpop.f32.mrf.mxu0
      %v358 = vadd.f32 %v277, %v357
      %v359 = vpop.f32.mrf.mxu0
      %360 = vdwg.mxu0
      %362 = vset.pattern.permute.xlu0 0
      %363 = vperm.xlu0 %362, %v265
      %v364 = vpop.permute.xlu0 %363
      %367 = vset.pattern.permute.xlu0 0
      %368 = vperm.xlu0 %367, %v266
      %v369 = vpop.permute.xlu0 %368
      %v371 = vmul.f32 %v364, %v353
      %v372 = vmul.f32 %v369, %v358
      %373 = vst.msk [vmem:[%s197] sm:$0xff] %vm226, %v371
      %374 = vst.msk [vmem:[%s197 + $0x8] sm:$0xff] %vm226, %v372
      %p375 = scmp.lt.s32.totalorder %s15, 1
      %s376 = scalar_select %p375, %s15, 1
      %s377 = smul.addr %s376, 2
      %s378 = smul.addr %s377, 8
      %s379 = scalar_lea.vmem %s4, %s378
      // Predicated region
      $region37: #{wtconv1d_forward.4} parent=35 // pred_check
        %p380 = pneg %p122
      $region38: #{wtconv1d_forward.4} parent=35 // pred_check_branch
        %382 = sbr.rel (%p380) target = $region40
      $region39: #{wtconv1d_forward.4} parent=35 // pred_region
        _
      $region40: #{wtconv1d_forward.4} parent=35 // pred_fallthru
        _
    $region36: #{wtconv1d_forward.4} parent=5 // pred_fallthru
      _
    %p383 = scmp.le.s32.totalorder 2, %s10
    // Predicated region
    $region41: #{wtconv1d_forward.4} parent=5 // pred_check
      %p384 = pneg %p383
    $region42: #{wtconv1d_forward.4} parent=5 // pred_check_branch
      %386 = sbr.rel (%p384) target = $region44
    $region43: #{wtconv1d_forward.4} parent=5 // pred_region
      %s387 = ssub.s32 %s10, 2
      // Predicated region
      $region45: #{wtconv1d_forward.4} parent=43 // pred_check
        %p388 = pneg %p128
      $region46: #{wtconv1d_forward.4} parent=43 // pred_check_branch
        %390 = sbr.rel (%p388) target = $region48
      $region47: #{wtconv1d_forward.4} parent=43 // pred_region
        %p391 = scmp.lt.s32.totalorder %s16, 1
        %s392 = scalar_select %p391, %s16, 1
        %s393 = smul.addr %s392, 2
        %s394 = smul.addr %s393, 8
        %s395 = scalar_lea.vmem %s4, %s394
      $region48: #{wtconv1d_forward.4} parent=43 // pred_fallthru
        _
    $region44: #{wtconv1d_forward.4} parent=5 // pred_fallthru
      _
  $region6: #{wtconv1d_forward.4} parent=0 // loop_footer
    %s14 = sadd.s32 1, %s10
  $region7: #{wtconv1d_forward.4} parent=0 // loop_footer_branch
    %9 = sbr.rel target = $region3
  $region8: #{wtconv1d_forward.4} parent=0 // loop_exit
    _

// kernel: wtconv1d_forward.3
$region0: #{wtconv1d_forward.3}
  #allocation0 [shape = 'u32[]', space=smem, size = 0x4, offset = 0x4, fixed_abs, tag = 'smem constant byte address 0x4 - core index']
  #allocation1 [shape = 'u32[144,128]{1,0:T(1,128)}', space=vmem, size = 0x12000, scoped, tag = 'internal scratch']
  #allocation2 [shape = 'f32[80,32]{1,0:T(8,128)}', space=vmem, size = 0xa000, scoped, tag = 'scratch operand']
  %s0 = inlined_call_operand.vmem [shape: f32[2,16,32], index: 0, kind: input, shape index: {}]
  %s1 = inlined_call_operand.vmem [shape: f32[16,80], index: 1, kind: input, shape index: {}]
  %s2 = inlined_call_operand.vmem [shape: f32[16,1], index: 2, kind: input, shape index: {}]
  %s3 = inlined_call_operand.vmem [shape: f32[16,1], index: 3, kind: input, shape index: {}]
  %s4 = inlined_call_operand.vmem [shape: f32[2,16,32], index: 4, kind: output, shape index: {}]
  %s5 = sld [smem:[#allocation0]]
  $region49: #{wtconv1d_forward.3} parent=0
    _
  %s7 = ssub.s32 1, %s5
  %s8 = scalar_select 0, %s7, %s5
  loop: start=0, step=1, limit=4
  $region2: #{wtconv1d_forward.3} parent=0 // loop_pre_header
    _
  $region3: #{wtconv1d_forward.3} parent=0 // loop_header
    %s10 = sphi 0, %s14
    %p11 = scmp.ge.s32.totalorder %s10, 4
    %s20 = sphi 0, %s22
    %s23 = sphi 0, %s20
    %s24 = sphi 0, %s23
    %s40 = sphi 0, %s24
    %s44 = sphi 0, %s44
    %s46 = sphi 0, %s44
    %s47 = sphi 0, %s46
    %s61 = sphi 0, %s47
    %s65 = sphi 0, %s65
    %s67 = sphi 0, %s65
    %s68 = sphi 0, %s67
    %s82 = sphi 0, %s68
    %s86 = sphi 0, %s86
    %s88 = sphi 0, %s86
    %s89 = sphi 0, %s88
    %s103 = sphi 0, %s89
    %s109 = sphi 0, %s111
    %s112 = sphi 0, %s109
    %s113 = sphi 0, %s112
    %s129 = sphi 0, %s113
  $region4: #{wtconv1d_forward.3} parent=0 // loop_header_branch
    %13 = sbr.rel (%p11) target = $region8
  $region5: #{wtconv1d_forward.3} parent=0 // loop_body
    %s15 = ssub.s32 %s10, 1
    %s16 = ssub.s32 %s10, 2
    %s17 = sadd.s32 %s10, 1
    %s18 = ssub.s32 %s10, %s17
    %p19 = scmp.eq.s32.totalorder %s18, 0
    %s21 = sadd.s32 %s20, 1
    %s22 = scalar_select %p19, %s20, %s21
    %p25 = pneg %p19
    %p26 = scmp.eq.s32.totalorder %s10, 1
    %p27 = por %p25, %p26
    %p28 = scmp.ne.s32.totalorder %s20, %s23
    %p29 = scmp.eq.s32.totalorder %s10, 0
    %p30 = por %p28, %p29
    %p31 = scmp.ne.s32.totalorder %s20, %s23
    %p32 = scmp.eq.s32.totalorder %s15, 1
    %p33 = por %p31, %p32
    %p34 = scmp.ne.s32.totalorder %s23, %s24
    %p35 = scmp.eq.s32.totalorder %s15, 0
    %p36 = por %p34, %p35
    %p37 = scmp.ne.s32.totalorder %s23, %s24
    %p38 = scmp.eq.s32.totalorder %s16, 1
    %p39 = por %p37, %p38
    %p41 = scmp.ne.s32.totalorder %s24, %s40
    %p42 = scmp.eq.s32.totalorder %s16, 0
    %p43 = por %p41, %p42
    %s45 = sadd.s32 %s44, 1
    %p48 = scmp.eq.s32.totalorder %s10, 1
    %p49 = scmp.ne.s32.totalorder %s44, %s46
    %p50 = scmp.eq.s32.totalorder %s10, 0
    %p51 = por %p49, %p50
    %p52 = scmp.ne.s32.totalorder %s44, %s46
    %p53 = scmp.eq.s32.totalorder %s15, 1
    %p54 = por %p52, %p53
    %p55 = scmp.ne.s32.totalorder %s46, %s47
    %p56 = scmp.eq.s32.totalorder %s15, 0
    %p57 = por %p55, %p56
    %p58 = scmp.ne.s32.totalorder %s46, %s47
    %p59 = scmp.eq.s32.totalorder %s16, 1
    %p60 = por %p58, %p59
    %p62 = scmp.ne.s32.totalorder %s47, %s61
    %p63 = scmp.eq.s32.totalorder %s16, 0
    %p64 = por %p62, %p63
    %s66 = sadd.s32 %s65, 1
    %p69 = scmp.eq.s32.totalorder %s10, 1
    %p70 = scmp.ne.s32.totalorder %s65, %s67
    %p71 = scmp.eq.s32.totalorder %s10, 0
    %p72 = por %p70, %p71
    %p73 = scmp.ne.s32.totalorder %s65, %s67
    %p74 = scmp.eq.s32.totalorder %s15, 1
    %p75 = por %p73, %p74
    %p76 = scmp.ne.s32.totalorder %s67, %s68
    %p77 = scmp.eq.s32.totalorder %s15, 0
    %p78 = por %p76, %p77
    %p79 = scmp.ne.s32.totalorder %s67, %s68
    %p80 = scmp.eq.s32.totalorder %s16, 1
    %p81 = por %p79, %p80
    %p83 = scmp.ne.s32.totalorder %s68, %s82
    %p84 = scmp.eq.s32.totalorder %s16, 0
    %p85 = por %p83, %p84
    %s87 = sadd.s32 %s86, 1
    %p90 = scmp.eq.s32.totalorder %s10, 1
    %p91 = scmp.ne.s32.totalorder %s86, %s88
    %p92 = scmp.eq.s32.totalorder %s10, 0
    %p93 = por %p91, %p92
    %p94 = scmp.ne.s32.totalorder %s86, %s88
    %p95 = scmp.eq.s32.totalorder %s15, 1
    %p96 = por %p94, %p95
    %p97 = scmp.ne.s32.totalorder %s88, %s89
    %p98 = scmp.eq.s32.totalorder %s15, 0
    %p99 = por %p97, %p98
    %p100 = scmp.ne.s32.totalorder %s88, %s89
    %p101 = scmp.eq.s32.totalorder %s16, 1
    %p102 = por %p100, %p101
    %p104 = scmp.ne.s32.totalorder %s89, %s103
    %p105 = scmp.eq.s32.totalorder %s16, 0
    %p106 = por %p104, %p105
    %s107 = ssub.s32 %s10, %s17
    %p108 = scmp.eq.s32.totalorder %s107, 0
    %s110 = sadd.s32 %s109, 1
    %s111 = scalar_select %p108, %s109, %s110
    %p114 = pneg %p108
    %p115 = scmp.eq.s32.totalorder %s10, 1
    %p116 = por %p114, %p115
    %p117 = scmp.ne.s32.totalorder %s109, %s112
    %p118 = scmp.eq.s32.totalorder %s10, 0
    %p119 = por %p117, %p118
    %p120 = scmp.ne.s32.totalorder %s109, %s112
    %p121 = scmp.eq.s32.totalorder %s15, 1
    %p122 = por %p120, %p121
    %p123 = scmp.ne.s32.totalorder %s112, %s113
    %p124 = scmp.eq.s32.totalorder %s15, 0
    %p125 = por %p123, %p124
    %p126 = scmp.ne.s32.totalorder %s112, %s113
    %p127 = scmp.eq.s32.totalorder %s16, 1
    %p128 = por %p126, %p127
    %p130 = scmp.ne.s32.totalorder %s113, %s129
    %p131 = scmp.eq.s32.totalorder %s16, 0
    %p132 = por %p130, %p131
    %p133 = scmp.le.s32.totalorder 1, %s10
    %p134 = scmp.lt.s32.totalorder %s10, 3
    %p135 = pnand %p133, %p134
    %p136 = pneg %p135
    // Predicated region
    $region9: #{wtconv1d_forward.3} parent=5 // pred_check
      _
    $region10: #{wtconv1d_forward.3} parent=5 // pred_check_branch
      %138 = sbr.rel (%p135) target = $region12
    $region11: #{wtconv1d_forward.3} parent=5 // pred_region
      %s139 = ssub.s32 %s10, 1
      // Predicated region
      $region13: #{wtconv1d_forward.3} parent=11 // pred_check
        %p140 = pneg %p57
      $region14: #{wtconv1d_forward.3} parent=11 // pred_check_branch
        %142 = sbr.rel (%p140) target = $region16
      $region15: #{wtconv1d_forward.3} parent=11 // pred_region
        _
      $region16: #{wtconv1d_forward.3} parent=11 // pred_fallthru
        _
      // Predicated region
      $region17: #{wtconv1d_forward.3} parent=11 // pred_check
        %p143 = pneg %p78
      $region18: #{wtconv1d_forward.3} parent=11 // pred_check_branch
        %145 = sbr.rel (%p143) target = $region20
      $region19: #{wtconv1d_forward.3} parent=11 // pred_region
        _
      $region20: #{wtconv1d_forward.3} parent=11 // pred_fallthru
        _
      // Predicated region
      $region21: #{wtconv1d_forward.3} parent=11 // pred_check
        %p146 = pneg %p99
      $region22: #{wtconv1d_forward.3} parent=11 // pred_check_branch
        %148 = sbr.rel (%p146) target = $region24
      $region23: #{wtconv1d_forward.3} parent=11 // pred_region
        _
      $region24: #{wtconv1d_forward.3} parent=11 // pred_fallthru
        _
    $region12: #{wtconv1d_forward.3} parent=5 // pred_fallthru
      _
    %p149 = scmp.lt.s32.totalorder %s10, 2
    // Predicated region
    $region25: #{wtconv1d_forward.3} parent=5 // pred_check
      %p150 = pneg %p149
    $region26: #{wtconv1d_forward.3} parent=5 // pred_check_branch
      %152 = sbr.rel (%p150) target = $region28
    $region27: #{wtconv1d_forward.3} parent=5 // pred_region
      // Predicated region
      $region29: #{wtconv1d_forward.3} parent=27 // pred_check
        %p153 = pneg %p30
      $region30: #{wtconv1d_forward.3} parent=27 // pred_check_branch
        %155 = sbr.rel (%p153) target = $region32
      $region31: #{wtconv1d_forward.3} parent=27 // pred_region
        %p156 = scmp.lt.s32.totalorder %s10, 1
        %s157 = scalar_select %p156, %s10, 1
        %s158 = smul.addr %s157, 2
        %s159 = smul.addr %s158, 8
        %s160 = scalar_lea.vmem %s0, %s159
      $region32: #{wtconv1d_forward.3} parent=27 // pred_fallthru
        _
    $region28: #{wtconv1d_forward.3} parent=5 // pred_fallthru
      _
    %p161 = scmp.le.s32.totalorder 1, %s10
    %p162 = scmp.lt.s32.totalorder %s10, 3
    %p163 = pnand %p161, %p162
    %p164 = pneg %p163
    // Predicated region
    $region33: #{wtconv1d_forward.3} parent=5 // pred_check
      _
    $region34: #{wtconv1d_forward.3} parent=5 // pred_check_branch
      %166 = sbr.rel (%p163) target = $region36
    $region35: #{wtconv1d_forward.3} parent=5 // pred_region
      %s167 = ssub.s32 %s10, 1
      %p168 = scmp.lt.s32.totalorder %s15, 1
      %s169 = scalar_select %p168, %s15, 1
      %s170 = smul.addr %s169, 2
      %s171 = smul.addr %s170, 8
      %s172 = scalar_lea.vmem %s0, %s171
      %p173 = pneg %p36
      %p174 = pneg %p33
      %p175 = pneg %p57
      %p176 = pneg %p54
      %p177 = pneg %p78
      %p178 = pneg %p75
      %p179 = pneg %p99
      %p180 = pneg %p96
      %p181 = pneg %p125
      %p182 = pneg %p122
      %p183 = scmp.lt.s32.totalorder %s15, 1
      %s184 = scalar_select %p183, %s15, 1
      %s185 = smul.addr %s184, 2
      %s186 = smul.addr %s185, 8
      %s187 = scalar_lea.vmem %s4, %s186
      %p188 = scmp.lt.s32.totalorder %s15, 1
      %s189 = scalar_select %p188, %s15, 1
      %s190 = smul.addr %s189, 2
      %s191 = smul.addr %s190, 8
      %s192 = scalar_lea.vmem %s0, %s191
      %p193 = scmp.lt.s32.totalorder %s15, 1
      %s194 = scalar_select %p193, %s15, 1
      %s195 = smul.addr %s194, 2
      %s196 = smul.addr %s195, 8
      %s197 = scalar_lea.vmem %s4, %s196
      %v198 = vld [vmem:[%s192] sm:$0xff]
      %v199 = vld [vmem:[%s192 + $0x8] sm:$0xff]
      %vm200 = vcmask 15360
      %201 = vst.msk [vmem:[#allocation2] sm:$0xff] %vm200, 0.0
      %202 = vst.msk [vmem:[#allocation2 + $0x8] sm:$0xff] %vm200, 0.0
      %205 = vrot.lane.b32.xlu0 %v198, 2
      %v206 = vpop.permute.xlu0 %205
      %207 = vrot.lane.b32.xlu0 %v199, 2
      %v208 = vpop.permute.xlu0 %207
      %vm211 = vcmask 261136
      %212 = vst.msk [vmem:[#allocation2] sm:$0xff] %vm211, %v206
      %213 = vst.msk [vmem:[#allocation2 + $0x8] sm:$0xff] %vm211, %v208
      %vm214 = vcmask 7168
      %215 = vst.msk [vmem:[#allocation2 + $0x10] sm:$0xff] %vm214, 0.0
      %216 = vst.msk [vmem:[#allocation2 + $0x18] sm:$0xff] %vm214, 0.0
      %217 = vrot.lane.b32.xlu0 %v198, 1
      %v218 = vpop.permute.xlu0 %217
      %219 = vrot.lane.b32.xlu0 %v199, 1
      %v220 = vpop.permute.xlu0 %219
      %vm223 = vcmask 261128
      %224 = vst.msk [vmem:[#allocation2 + $0x10] sm:$0xff] %vm223, %v218
      %225 = vst.msk [vmem:[#allocation2 + $0x18] sm:$0xff] %vm223, %v220
      %vm226 = vcmask 261120
      %227 = vst.msk [vmem:[#allocation2 + $0x20] sm:$0xff] %vm226, %v198
      %228 = vst.msk [vmem:[#allocation2 + $0x28] sm:$0xff] %vm226, %v199
      %229 = vrot.lane.b32.xlu0 %v198, 127
      %v230 = vpop.permute.xlu0 %229
      %231 = vrot.lane.b32.xlu0 %v199, 127
      %v232 = vpop.permute.xlu0 %231
      %vm235 = vcmask 252928
      %236 = vst.msk [vmem:[#allocation2 + $0x30] sm:$0xff] %vm235, %v230
      %237 = vst.msk [vmem:[#allocation2 + $0x38] sm:$0xff] %vm235, %v232
      %vm238 = vcmask 261368
      %239 = vst.msk [vmem:[#allocation2 + $0x30] sm:$0xff] %vm238, 0.0
      %240 = vst.msk [vmem:[#allocation2 + $0x38] sm:$0xff] %vm238, 0.0
      %241 = vrot.lane.b32.xlu0 %v198, 126
      %v242 = vpop.permute.xlu0 %241
      %243 = vrot.lane.b32.xlu0 %v199, 126
      %v244 = vpop.permute.xlu0 %243
      %vm247 = vcmask 244736
      %248 = vst.msk [vmem:[#allocation2 + $0x40] sm:$0xff] %vm247, %v242
      %249 = vst.msk [vmem:[#allocation2 + $0x48] sm:$0xff] %vm247, %v244
      %vm250 = vcmask 261360
      %251 = vst.msk [vmem:[#allocation2 + $0x40] sm:$0xff] %vm250, 0.0
      %252 = vst.msk [vmem:[#allocation2 + $0x48] sm:$0xff] %vm250, 0.0
      %v253 = vld [vmem:[%s1] sm:$0xff]
      %v254 = vld [vmem:[%s1 + $0x8] sm:$0xff]
      %v255 = vld [vmem:[#allocation2] sm:$0xff]
      %v256 = vld [vmem:[#allocation2 + $0x8] sm:$0xff]
      %v257 = vld [vmem:[#allocation2 + $0x10] sm:$0xff]
      %v258 = vld [vmem:[#allocation2 + $0x18] sm:$0xff]
      %v259 = vld [vmem:[#allocation2 + $0x20] sm:$0xff]
      %v260 = vld [vmem:[#allocation2 + $0x28] sm:$0xff]
      %v261 = vld [vmem:[#allocation2 + $0x30] sm:$0xff]
      %v262 = vld [vmem:[#allocation2 + $0x38] sm:$0xff]
      %v263 = vld [vmem:[#allocation2 + $0x40] sm:$0xff]
      %v264 = vld [vmem:[#allocation2 + $0x48] sm:$0xff]
      %v265 = vld [vmem:[%s2] sm:$0xff]
      %v266 = vld [vmem:[%s2 + $0x8] sm:$0xff]
      %v267 = vld [vmem:[%s3] sm:$0xff]
      %v268 = vld [vmem:[%s3 + $0x8] sm:$0xff]
      %270 = vset.pattern.permute.xlu0 0
      %271 = vperm.xlu0 %270, %v267
      %v272 = vpop.permute.xlu0 %271
      %275 = vset.pattern.permute.xlu0 0
      %276 = vperm.xlu0 %275, %v268
      %v277 = vpop.permute.xlu0 %276
      %vm279 = vcmask 654336
      %v281 = vsel %vm279, %v253, 0
      %v284 = vsel %vm279, %v254, 0
      %286 = vmatprep.subr.mxu0 0.0
      %287 = vmatpush1.msra.mxu0 0.0
      %288 = vmatprep.subr.mxu0 0.0
      %289 = vmatpush1.msra.mxu0 0.0
      %290 = vmatprep.subr.mxu0 0.0
      %291 = vmatpush1.msra.mxu0 0.0
      %292 = vmatprep.subr.mxu0 0.0
      %293 = vmatpush1.msra.mxu0 0.0
      %294 = vmatprep.subr.mxu0 0.0
      %295 = vmatpush1.msra.mxu0 0.0
      %296 = vmatprep.subr.mxu0 0.0
      %297 = vmatpush1.msra.mxu0 0.0
      %298 = vmatprep.subr.mxu0 0.0
      %299 = vmatpush1.msra.mxu0 %v264
      %300 = vmatprep.subr.mxu0 0.0
      %301 = vmatpush1.msra.mxu0 %v263
      %302 = vmatprep.subr.mxu0 0.0
      %303 = vmatpush1.msra.mxu0 %v262
      %304 = vmatprep.subr.mxu0 0.0
      %305 = vmatpush1.msra.mxu0 %v261
      %306 = vmatprep.subr.mxu0 0.0
      %307 = vmatpush1.msra.mxu0 %v260
      %308 = vmatprep.subr.mxu0 0.0
      %309 = vmatpush1.msra.mxu0 %v259
      %310 = vmatprep.subr.mxu0 0.0
      %311 = vmatpush1.msra.mxu0 %v258
      %312 = vmatprep.subr.mxu0 0.0
      %313 = vmatpush1.msra.mxu0 %v257
      %314 = vmatprep.subr.mxu0 0.0
      %315 = vmatpush1.msra.mxu0 %v256
      %316 = vmatprep.subr.mxu0 0.0
      %317 = vmatpush1.msra.mxu0 %v255
      %318 = vmatprep.subr.mxu0 0.0
      %319 = vmatpush2.msra.mxu0 0.0
      %320 = vmatprep.subr.mxu0 0.0
      %321 = vmatpush2.msra.mxu0 0.0
      %322 = vmatprep.subr.mxu0 0.0
      %323 = vmatpush2.msra.mxu0 0.0
      %324 = vmatprep.subr.mxu0 0.0
      %325 = vmatpush2.msra.mxu0 0.0
      %326 = vmatprep.subr.mxu0 0.0
      %327 = vmatpush2.msra.mxu0 0.0
      %328 = vmatprep.subr.mxu0 0.0
      %329 = vmatpush2.msra.mxu0 0.0
      %330 = vmatprep.subr.mxu0 0.0
      %331 = vmatpush2.msra.mxu0 0.0
      %332 = vmatprep.subr.mxu0 0.0
      %333 = vmatpush2.msra.mxu0 0.0
      %334 = vmatprep.subr.mxu0 0.0
      %335 = vmatpush2.msra.mxu0 0.0
      %336 = vmatprep.subr.mxu0 0.0
      %337 = vmatpush2.msra.mxu0 0.0
      %338 = vmatprep.subr.mxu0 0.0
      %339 = vmatpush2.msra.mxu0 0.0
      %340 = vmatprep.subr.mxu0 0.0
      %341 = vmatpush2.msra.mxu0 0.0
      %342 = vmatprep.subr.mxu0 0.0
      %343 = vmatpush2.msra.mxu0 0.0
      %344 = vmatprep.subr.mxu0 0.0
      %345 = vmatpush2.msra.mxu0 0.0
      %346 = vmatprep.subr.mxu0 0.0
      %347 = vmatpush2.msra.mxu0 0.0
      %348 = vmatprep.subr.mxu0 0.0
      %349 = vmatpush2.msra.mxu0 0.0
      %350 = vmatprep.mubr.f32.mxu0 0.0
      %351 = vmatmul.mubr.f32.gmra.mxu0 %v281
      %v352 = vpop.f32.mrf.mxu0
      %v353 = vadd.f32 %v272, %v352
      %v354 = vpop.f32.mrf.mxu0
      %355 = vmatprep.mubr.f32.mxu0 0.0
      %356 = vmatmul.mubr.f32.gmra.mxu0 %v284
      %v357 = vpop.f32.mrf.mxu0
      %v358 = vadd.f32 %v277, %v357
      %v359 = vpop.f32.mrf.mxu0
      %360 = vdwg.mxu0
      %362 = vset.pattern.permute.xlu0 0
      %363 = vperm.xlu0 %362, %v265
      %v364 = vpop.permute.xlu0 %363
      %367 = vset.pattern.permute.xlu0 0
      %368 = vperm.xlu0 %367, %v266
      %v369 = vpop.permute.xlu0 %368
      %v371 = vmul.f32 %v364, %v353
      %v372 = vmul.f32 %v369, %v358
      %373 = vst.msk [vmem:[%s197] sm:$0xff] %vm226, %v371
      %374 = vst.msk [vmem:[%s197 + $0x8] sm:$0xff] %vm226, %v372
      %p375 = scmp.lt.s32.totalorder %s15, 1
      %s376 = scalar_select %p375, %s15, 1
      %s377 = smul.addr %s376, 2
      %s378 = smul.addr %s377, 8
      %s379 = scalar_lea.vmem %s4, %s378
      // Predicated region
      $region37: #{wtconv1d_forward.3} parent=35 // pred_check
        %p380 = pneg %p122
      $region38: #{wtconv1d_forward.3} parent=35 // pred_check_branch
        %382 = sbr.rel (%p380) target = $region40
      $region39: #{wtconv1d_forward.3} parent=35 // pred_region
        _
      $region40: #{wtconv1d_forward.3} parent=35 // pred_fallthru
        _
    $region36: #{wtconv1d_forward.3} parent=5 // pred_fallthru
      _
    %p383 = scmp.le.s32.totalorder 2, %s10
    // Predicated region
    $region41: #{wtconv1d_forward.3} parent=5 // pred_check
      %p384 = pneg %p383
    $region42: #{wtconv1d_forward.3} parent=5 // pred_check_branch
      %386 = sbr.rel (%p384) target = $region44
    $region43: #{wtconv1d_forward.3} parent=5 // pred_region
      %s387 = ssub.s32 %s10, 2
      // Predicated region
      $region45: #{wtconv1d_forward.3} parent=43 // pred_check
        %p388 = pneg %p128
      $region46: #{wtconv1d_forward.3} parent=43 // pred_check_branch
        %390 = sbr.rel (%p388) target = $region48
      $region47: #{wtconv1d_forward.3} parent=43 // pred_region
        %p391 = scmp.lt.s32.totalorder %s16, 1
        %s392 = scalar_select %p391, %s16, 1
        %s393 = smul.addr %s392, 2
        %s394 = smul.addr %s393, 8
        %s395 = scalar_lea.vmem %s4, %s394
      $region48: #{wtconv1d_forward.3} parent=43 // pred_fallthru
        _
    $region44: #{wtconv1d_forward.3} parent=5 // pred_fallthru
      _
  $region6: #{wtconv1d_forward.3} parent=0 // loop_footer
    %s14 = sadd.s32 1, %s10
  $region7: #{wtconv1d_forward.3} parent=0 // loop_footer_branch
    %9 = sbr.rel target = $region3
  $region8: #{wtconv1d_forward.3} parent=0 // loop_exit
    _

// kernel: wtconv1d_forward.5
$region0: #{wtconv1d_forward.5}
  #allocation0 [shape = 'u32[]', space=smem, size = 0x4, offset = 0x4, fixed_abs, tag = 'smem constant byte address 0x4 - core index']
  #allocation1 [shape = 'u32[144,128]{1,0:T(1,128)}', space=vmem, size = 0x12000, scoped, tag = 'internal scratch']
  #allocation2 [shape = 'f32[40,64]{1,0:T(8,128)}', space=vmem, size = 0x5000, scoped, tag = 'scratch operand']
  %s0 = inlined_call_operand.vmem [shape: f32[2,8,64], index: 0, kind: input, shape index: {}]
  %s1 = inlined_call_operand.vmem [shape: f32[8,40], index: 1, kind: input, shape index: {}]
  %s2 = inlined_call_operand.vmem [shape: f32[8,1], index: 2, kind: input, shape index: {}]
  %s3 = inlined_call_operand.vmem [shape: f32[8,1], index: 3, kind: input, shape index: {}]
  %s4 = inlined_call_operand.vmem [shape: f32[2,8,64], index: 4, kind: input, shape index: {}]
  %s5 = inlined_call_operand.hbm [shape: f32[2,8,64], index: 5, kind: output, shape index: {}]
  %s6 = sld [smem:[#allocation0]]
  $region53: #{wtconv1d_forward.5} parent=0
    _
  %s8 = ssub.s32 1, %s6
  %s9 = scalar_select 0, %s8, %s6
  $region1: #{wtconv1d_forward.5} parent=0
    #allocation3 [shape = 'u8[8192]{0}', space=vmem, size = 0x2000, scoped, tag = 'output window, operand 0']
    #allocation4 [shape = 's32[2]{0}', space=sflag, size = 0x8, scoped, tag = 'scoped memory for wtconv1d_forward.5']
    %10 = vsyncpa [#allocation4], 0
    %s11 = scalar_lea.sflag [#allocation4], 1
    %12 = vsyncpa %s11, 0
    loop: start=0, step=1, limit=4
    $region2: #{wtconv1d_forward.5} parent=1 // loop_pre_header
      _
    $region3: #{wtconv1d_forward.5} parent=1 // loop_header
      %s14 = sphi 0, %s18
      %p15 = scmp.ge.s32.totalorder %s14, 4
      %s24 = sphi 0, %s26
      %s27 = sphi 0, %s24
      %s28 = sphi 0, %s27
      %s44 = sphi 0, %s28
      %s48 = sphi 0, %s48
      %s50 = sphi 0, %s48
      %s51 = sphi 0, %s50
      %s65 = sphi 0, %s51
      %s69 = sphi 0, %s69
      %s71 = sphi 0, %s69
      %s72 = sphi 0, %s71
      %s86 = sphi 0, %s72
      %s90 = sphi 0, %s90
      %s92 = sphi 0, %s90
      %s93 = sphi 0, %s92
      %s107 = sphi 0, %s93
      %s113 = sphi 0, %s115
      %s116 = sphi 0, %s113
      %s117 = sphi 0, %s116
      %s133 = sphi 0, %s117
      %s139 = sphi 0, %s141
      %s142 = sphi 0, %s139
      %s143 = sphi 0, %s142
      %s159 = sphi 0, %s143
    $region4: #{wtconv1d_forward.5} parent=1 // loop_header_branch
      %17 = sbr.rel (%p15) target = $region8
    $region5: #{wtconv1d_forward.5} parent=1 // loop_body
      %s19 = ssub.s32 %s14, 1
      %s20 = ssub.s32 %s14, 2
      %s21 = sadd.s32 %s14, 1
      %s22 = ssub.s32 %s14, %s21
      %p23 = scmp.eq.s32.totalorder %s22, 0
      %s25 = sadd.s32 %s24, 1
      %s26 = scalar_select %p23, %s24, %s25
      %p29 = pneg %p23
      %p30 = scmp.eq.s32.totalorder %s14, 1
      %p31 = por %p29, %p30
      %p32 = scmp.ne.s32.totalorder %s24, %s27
      %p33 = scmp.eq.s32.totalorder %s14, 0
      %p34 = por %p32, %p33
      %p35 = scmp.ne.s32.totalorder %s24, %s27
      %p36 = scmp.eq.s32.totalorder %s19, 1
      %p37 = por %p35, %p36
      %p38 = scmp.ne.s32.totalorder %s27, %s28
      %p39 = scmp.eq.s32.totalorder %s19, 0
      %p40 = por %p38, %p39
      %p41 = scmp.ne.s32.totalorder %s27, %s28
      %p42 = scmp.eq.s32.totalorder %s20, 1
      %p43 = por %p41, %p42
      %p45 = scmp.ne.s32.totalorder %s28, %s44
      %p46 = scmp.eq.s32.totalorder %s20, 0
      %p47 = por %p45, %p46
      %s49 = sadd.s32 %s48, 1
      %p52 = scmp.eq.s32.totalorder %s14, 1
      %p53 = scmp.ne.s32.totalorder %s48, %s50
      %p54 = scmp.eq.s32.totalorder %s14, 0
      %p55 = por %p53, %p54
      %p56 = scmp.ne.s32.totalorder %s48, %s50
      %p57 = scmp.eq.s32.totalorder %s19, 1
      %p58 = por %p56, %p57
      %p59 = scmp.ne.s32.totalorder %s50, %s51
      %p60 = scmp.eq.s32.totalorder %s19, 0
      %p61 = por %p59, %p60
      %p62 = scmp.ne.s32.totalorder %s50, %s51
      %p63 = scmp.eq.s32.totalorder %s20, 1
      %p64 = por %p62, %p63
      %p66 = scmp.ne.s32.totalorder %s51, %s65
      %p67 = scmp.eq.s32.totalorder %s20, 0
      %p68 = por %p66, %p67
      %s70 = sadd.s32 %s69, 1
      %p73 = scmp.eq.s32.totalorder %s14, 1
      %p74 = scmp.ne.s32.totalorder %s69, %s71
      %p75 = scmp.eq.s32.totalorder %s14, 0
      %p76 = por %p74, %p75
      %p77 = scmp.ne.s32.totalorder %s69, %s71
      %p78 = scmp.eq.s32.totalorder %s19, 1
      %p79 = por %p77, %p78
      %p80 = scmp.ne.s32.totalorder %s71, %s72
      %p81 = scmp.eq.s32.totalorder %s19, 0
      %p82 = por %p80, %p81
      %p83 = scmp.ne.s32.totalorder %s71, %s72
      %p84 = scmp.eq.s32.totalorder %s20, 1
      %p85 = por %p83, %p84
      %p87 = scmp.ne.s32.totalorder %s72, %s86
      %p88 = scmp.eq.s32.totalorder %s20, 0
      %p89 = por %p87, %p88
      %s91 = sadd.s32 %s90, 1
      %p94 = scmp.eq.s32.totalorder %s14, 1
      %p95 = scmp.ne.s32.totalorder %s90, %s92
      %p96 = scmp.eq.s32.totalorder %s14, 0
      %p97 = por %p95, %p96
      %p98 = scmp.ne.s32.totalorder %s90, %s92
      %p99 = scmp.eq.s32.totalorder %s19, 1
      %p100 = por %p98, %p99
      %p101 = scmp.ne.s32.totalorder %s92, %s93
      %p102 = scmp.eq.s32.totalorder %s19, 0
      %p103 = por %p101, %p102
      %p104 = scmp.ne.s32.totalorder %s92, %s93
      %p105 = scmp.eq.s32.totalorder %s20, 1
      %p106 = por %p104, %p105
      %p108 = scmp.ne.s32.totalorder %s93, %s107
      %p109 = scmp.eq.s32.totalorder %s20, 0
      %p110 = por %p108, %p109
      %s111 = ssub.s32 %s14, %s21
      %p112 = scmp.eq.s32.totalorder %s111, 0
      %s114 = sadd.s32 %s113, 1
      %s115 = scalar_select %p112, %s113, %s114
      %p118 = pneg %p112
      %p119 = scmp.eq.s32.totalorder %s14, 1
      %p120 = por %p118, %p119
      %p121 = scmp.ne.s32.totalorder %s113, %s116
      %p122 = scmp.eq.s32.totalorder %s14, 0
      %p123 = por %p121, %p122
      %p124 = scmp.ne.s32.totalorder %s113, %s116
      %p125 = scmp.eq.s32.totalorder %s19, 1
      %p126 = por %p124, %p125
      %p127 = scmp.ne.s32.totalorder %s116, %s117
      %p128 = scmp.eq.s32.totalorder %s19, 0
      %p129 = por %p127, %p128
      %p130 = scmp.ne.s32.totalorder %s116, %s117
      %p131 = scmp.eq.s32.totalorder %s20, 1
      %p132 = por %p130, %p131
      %p134 = scmp.ne.s32.totalorder %s117, %s133
      %p135 = scmp.eq.s32.totalorder %s20, 0
      %p136 = por %p134, %p135
      %s137 = ssub.s32 %s14, %s21
      %p138 = scmp.eq.s32.totalorder %s137, 0
      %s140 = sadd.s32 %s139, 1
      %s141 = scalar_select %p138, %s139, %s140
      %p144 = pneg %p138
      %p145 = scmp.eq.s32.totalorder %s14, 1
      %p146 = por %p144, %p145
      %p147 = scmp.ne.s32.totalorder %s139, %s142
      %p148 = scmp.eq.s32.totalorder %s14, 0
      %p149 = por %p147, %p148
      %p150 = scmp.ne.s32.totalorder %s139, %s142
      %p151 = scmp.eq.s32.totalorder %s19, 1
      %p152 = por %p150, %p151
      %p153 = scmp.ne.s32.totalorder %s142, %s143
      %p154 = scmp.eq.s32.totalorder %s19, 0
      %p155 = por %p153, %p154
      %p156 = scmp.ne.s32.totalorder %s142, %s143
      %p157 = scmp.eq.s32.totalorder %s20, 1
      %p158 = por %p156, %p157
      %p160 = scmp.ne.s32.totalorder %s143, %s159
      %p161 = scmp.eq.s32.totalorder %s20, 0
      %p162 = por %p160, %p161
      %p163 = scmp.le.s32.totalorder 1, %s14
      %p164 = scmp.lt.s32.totalorder %s14, 3
      %p165 = pnand %p163, %p164
      %p166 = pneg %p165
      // Predicated region
      $region9: #{wtconv1d_forward.5} parent=5 // pred_check
        _
      $region10: #{wtconv1d_forward.5} parent=5 // pred_check_branch
        %168 = sbr.rel (%p165) target = $region12
      $region11: #{wtconv1d_forward.5} parent=5 // pred_region
        %s169 = ssub.s32 %s14, 1
        // Predicated region
        $region13: #{wtconv1d_forward.5} parent=11 // pred_check
          %p170 = pneg %p61
        $region14: #{wtconv1d_forward.5} parent=11 // pred_check_branch
          %172 = sbr.rel (%p170) target = $region16
        $region15: #{wtconv1d_forward.5} parent=11 // pred_region
          _
        $region16: #{wtconv1d_forward.5} parent=11 // pred_fallthru
          _
        // Predicated region
        $region17: #{wtconv1d_forward.5} parent=11 // pred_check
          %p173 = pneg %p82
        $region18: #{wtconv1d_forward.5} parent=11 // pred_check_branch
          %175 = sbr.rel (%p173) target = $region20
        $region19: #{wtconv1d_forward.5} parent=11 // pred_region
          _
        $region20: #{wtconv1d_forward.5} parent=11 // pred_fallthru
          _
        // Predicated region
        $region21: #{wtconv1d_forward.5} parent=11 // pred_check
          %p176 = pneg %p103
        $region22: #{wtconv1d_forward.5} parent=11 // pred_check_branch
          %178 = sbr.rel (%p176) target = $region24
        $region23: #{wtconv1d_forward.5} parent=11 // pred_region
          _
        $region24: #{wtconv1d_forward.5} parent=11 // pred_fallthru
          _
      $region12: #{wtconv1d_forward.5} parent=5 // pred_fallthru
        _
      %p179 = scmp.lt.s32.totalorder %s14, 2
      // Predicated region
      $region25: #{wtconv1d_forward.5} parent=5 // pred_check
        %p180 = pneg %p179
      $region26: #{wtconv1d_forward.5} parent=5 // pred_check_branch
        %182 = sbr.rel (%p180) target = $region28
      $region27: #{wtconv1d_forward.5} parent=5 // pred_region
        // Predicated region
        $region29: #{wtconv1d_forward.5} parent=27 // pred_check
          %p183 = pneg %p34
        $region30: #{wtconv1d_forward.5} parent=27 // pred_check_branch
          %185 = sbr.rel (%p183) target = $region32
        $region31: #{wtconv1d_forward.5} parent=27 // pred_region
          %p186 = scmp.lt.s32.totalorder %s14, 1
          %s187 = scalar_select %p186, %s14, 1
          %s188 = smul.addr %s187, 8
          %s189 = scalar_lea.vmem %s0, %s188
        $region32: #{wtconv1d_forward.5} parent=27 // pred_fallthru
          _
        // Predicated region
        $region33: #{wtconv1d_forward.5} parent=27 // pred_check
          %p190 = pneg %p123
        $region34: #{wtconv1d_forward.5} parent=27 // pred_check_branch
          %192 = sbr.rel (%p190) target = $region36
        $region35: #{wtconv1d_forward.5} parent=27 // pred_region
          %p193 = scmp.lt.s32.totalorder %s14, 1
          %s194 = scalar_select %p193, %s14, 1
          %s195 = smul.addr %s194, 8
          %s196 = scalar_lea.vmem %s4, %s195
        $region36: #{wtconv1d_forward.5} parent=27 // pred_fallthru
          _
      $region28: #{wtconv1d_forward.5} parent=5 // pred_fallthru
        _
      %p197 = scmp.le.s32.totalorder 1, %s14
      %p198 = scmp.lt.s32.totalorder %s14, 3
      %p199 = pnand %p197, %p198
      %p200 = pneg %p199
      // Predicated region
      $region37: #{wtconv1d_forward.5} parent=5 // pred_check
        _
      $region38: #{wtconv1d_forward.5} parent=5 // pred_check_branch
        %202 = sbr.rel (%p199) target = $region40
      $region39: #{wtconv1d_forward.5} parent=5 // pred_region
        %s203 = ssub.s32 %s14, 1
        %p204 = scmp.lt.s32.totalorder %s19, 1
        %s205 = scalar_select %p204, %s19, 1
        %s206 = smul.addr %s205, 8
        %s207 = scalar_lea.vmem %s0, %s206
        %p208 = pneg %p40
        %p209 = pneg %p37
        %p210 = pneg %p61
        %p211 = pneg %p58
        %p212 = pneg %p82
        %p213 = pneg %p79
        %p214 = pneg %p103
        %p215 = pneg %p100
        %p216 = scmp.lt.s32.totalorder %s19, 1
        %s217 = scalar_select %p216, %s19, 1
        %s218 = smul.addr %s217, 8
        %s219 = scalar_lea.vmem %s4, %s218
        %p220 = pneg %p129
        %p221 = pneg %p126
        %p222 = pneg %p155
        %p223 = pneg %p152
        %s224 = sand.u32 %s142, 1
        %s225 = scalar_lea.sflag [#allocation4], %s224
        %s226 = sand.u32 %s142, 1
        %s227 = smul.addr %s226, 8
        %s228 = scalar_lea.vmem [#allocation3], %s227
        %p229 = scmp.lt.s32.totalorder %s19, 1
        %s230 = scalar_select %p229, %s19, 1
        %s231 = smul.addr %s230, 8
        %s232 = scalar_lea.vmem %s0, %s231
        %p233 = scmp.lt.s32.totalorder %s19, 1
        %s234 = scalar_select %p233, %s19, 1
        %s235 = smul.addr %s234, 8
        %s236 = scalar_lea.vmem %s4, %s235
        %v237 = vld [vmem:[%s232] sm:$0xff]
        %vm238 = vcmask 15360
        %239 = vst.msk [vmem:[#allocation2] sm:$0xff] %vm238, 0.0
        %241 = vrot.lane.b32.xlu0 %v237, 2
        %v242 = vpop.permute.xlu0 %241
        %vm244 = vcmask 523280
        %245 = vst.msk [vmem:[#allocation2] sm:$0xff] %vm244, %v242
        %vm246 = vcmask 7168
        %247 = vst.msk [vmem:[#allocation2 + $0x8] sm:$0xff] %vm246, 0.0
        %248 = vrot.lane.b32.xlu0 %v237, 1
        %v249 = vpop.permute.xlu0 %248
        %vm251 = vcmask 523272
        %252 = vst.msk [vmem:[#allocation2 + $0x8] sm:$0xff] %vm251, %v249
        %vm253 = vcmask 523264
        %254 = vst.msk [vmem:[#allocation2 + $0x10] sm:$0xff] %vm253, %v237
        %255 = vrot.lane.b32.xlu0 %v237, 127
        %v256 = vpop.permute.xlu0 %255
        %vm258 = vcmask 515072
        %259 = vst.msk [vmem:[#allocation2 + $0x18] sm:$0xff] %vm258, %v256
        %vm260 = vcmask 523768
        %261 = vst.msk [vmem:[#allocation2 + $0x18] sm:$0xff] %vm260, 0.0
        %262 = vrot.lane.b32.xlu0 %v237, 126
        %v263 = vpop.permute.xlu0 %262
        %vm265 = vcmask 506880
        %266 = vst.msk [vmem:[#allocation2 + $0x20] sm:$0xff] %vm265, %v263
        %vm267 = vcmask 523760
        %268 = vst.msk [vmem:[#allocation2 + $0x20] sm:$0xff] %vm267, 0.0
        %v269 = vld [vmem:[%s1] sm:$0xff]
        %v270 = vld [vmem:[#allocation2] sm:$0xff]
        %v271 = vld [vmem:[#allocation2 + $0x8] sm:$0xff]
        %v272 = vld [vmem:[#allocation2 + $0x10] sm:$0xff]
        %v273 = vld [vmem:[#allocation2 + $0x18] sm:$0xff]
        %v274 = vld [vmem:[#allocation2 + $0x20] sm:$0xff]
        %v275 = vld [vmem:[%s2] sm:$0xff]
        %v276 = vld [vmem:[%s3] sm:$0xff]
        %278 = vset.pattern.permute.xlu0 0
        %279 = vperm.xlu0 %278, %v276
        %v280 = vpop.permute.xlu0 %279
        %vm282 = vcmask 326656
        %v284 = vsel %vm282, %v269, 0
        %286 = vmatprep.subr.mxu0 0.0
        %287 = vmatpush1.msra.mxu0 0.0
        %288 = vmatprep.subr.mxu0 0.0
        %289 = vmatpush1.msra.mxu0 0.0
        %290 = vmatprep.subr.mxu0 0.0
        %291 = vmatpush1.msra.mxu0 0.0
        %292 = vmatprep.subr.mxu0 0.0
        %293 = vmatpush1.msra.mxu0 0.0
        %294 = vmatprep.subr.mxu0 0.0
        %295 = vmatpush1.msra.mxu0 0.0
        %296 = vmatprep.subr.mxu0 0.0
        %297 = vmatpush1.msra.mxu0 0.0
        %298 = vmatprep.subr.mxu0 0.0
        %299 = vmatpush1.msra.mxu0 0.0
        %300 = vmatprep.subr.mxu0 0.0
        %301 = vmatpush1.msra.mxu0 0.0
        %302 = vmatprep.subr.mxu0 0.0
        %303 = vmatpush1.msra.mxu0 0.0
        %304 = vmatprep.subr.mxu0 0.0
        %305 = vmatpush1.msra.mxu0 0.0
        %306 = vmatprep.subr.mxu0 0.0
        %307 = vmatpush1.msra.mxu0 0.0
        %308 = vmatprep.subr.mxu0 0.0
        %309 = vmatpush1.msra.mxu0 %v274
        %310 = vmatprep.subr.mxu0 0.0
        %311 = vmatpush1.msra.mxu0 %v273
        %312 = vmatprep.subr.mxu0 0.0
        %313 = vmatpush1.msra.mxu0 %v272
        %314 = vmatprep.subr.mxu0 0.0
        %315 = vmatpush1.msra.mxu0 %v271
        %316 = vmatprep.subr.mxu0 0.0
        %317 = vmatpush1.msra.mxu0 %v270
        %318 = vmatprep.subr.mxu0 0.0
        %319 = vmatpush2.msra.mxu0 0.0
        %320 = vmatprep.subr.mxu0 0.0
        %321 = vmatpush2.msra.mxu0 0.0
        %322 = vmatprep.subr.mxu0 0.0
        %323 = vmatpush2.msra.mxu0 0.0
        %324 = vmatprep.subr.mxu0 0.0
        %325 = vmatpush2.msra.mxu0 0.0
        %326 = vmatprep.subr.mxu0 0.0
        %327 = vmatpush2.msra.mxu0 0.0
        %328 = vmatprep.subr.mxu0 0.0
        %329 = vmatpush2.msra.mxu0 0.0
        %330 = vmatprep.subr.mxu0 0.0
        %331 = vmatpush2.msra.mxu0 0.0
        %332 = vmatprep.subr.mxu0 0.0
        %333 = vmatpush2.msra.mxu0 0.0
        %334 = vmatprep.subr.mxu0 0.0
        %335 = vmatpush2.msra.mxu0 0.0
        %336 = vmatprep.subr.mxu0 0.0
        %337 = vmatpush2.msra.mxu0 0.0
        %338 = vmatprep.subr.mxu0 0.0
        %339 = vmatpush2.msra.mxu0 0.0
        %340 = vmatprep.subr.mxu0 0.0
        %341 = vmatpush2.msra.mxu0 0.0
        %342 = vmatprep.subr.mxu0 0.0
        %343 = vmatpush2.msra.mxu0 0.0
        %344 = vmatprep.subr.mxu0 0.0
        %345 = vmatpush2.msra.mxu0 0.0
        %346 = vmatprep.subr.mxu0 0.0
        %347 = vmatpush2.msra.mxu0 0.0
        %348 = vmatprep.subr.mxu0 0.0
        %349 = vmatpush2.msra.mxu0 0.0
        %350 = vmatprep.mubr.f32.mxu0 0.0
        %351 = vmatmul.mubr.f32.gmra.mxu0 %v284
        %v352 = vpop.f32.mrf.mxu0
        %v353 = vadd.f32 %v280, %v352
        %v354 = vpop.f32.mrf.mxu0
        %355 = vdwg.mxu0
        %357 = vset.pattern.permute.xlu0 0
        %358 = vperm.xlu0 %357, %v275
        %v359 = vpop.permute.xlu0 %358
        %v361 = vmul.f32 %v359, %v353
        %v362 = vld [vmem:[%s236] sm:$0xff]
        %v363 = vadd.f32 %v361, %v362
        %364 = vst.msk [vmem:[%s228] sm:$0xff] %vm253, %v363
        %s365 = sand.u32 %s142, 1
        %s366 = scalar_lea.sflag [#allocation4], %s365
        %s367 = sand.u32 %s142, 1
        %s368 = smul.addr %s367, 8
        %s369 = scalar_lea.vmem [#allocation3], %s368
        // Predicated region
        $region41: #{wtconv1d_forward.5} parent=39 // pred_check
          %p370 = pneg %p152
        $region42: #{wtconv1d_forward.5} parent=39 // pred_check_branch
          %372 = sbr.rel (%p370) target = $region44
        $region43: #{wtconv1d_forward.5} parent=39 // pred_region
          %s374 = ssub.s32 128, 128
          %375 = vsyncadd %s366, %s374
          %s376 = smul.addr %s19, 128
          %s377 = scalar_lea.hbm %s5, %s376
          %s379 = sshll.u32 %s369, 4
          %s380 = int_to_ptr.vmem [resolvable:$true] %s379
          %382 = dma.vmem_to_hbm [thread:$0]  %s380, 128, %s377, %s366
        $region44: #{wtconv1d_forward.5} parent=39 // pred_fallthru
          _
      $region40: #{wtconv1d_forward.5} parent=5 // pred_fallthru
        _
      %p383 = scmp.le.s32.totalorder 2, %s14
      // Predicated region
      $region45: #{wtconv1d_forward.5} parent=5 // pred_check
        %p384 = pneg %p383
      $region46: #{wtconv1d_forward.5} parent=5 // pred_check_branch
        %386 = sbr.rel (%p384) target = $region48
      $region47: #{wtconv1d_forward.5} parent=5 // pred_region
        %s387 = ssub.s32 %s14, 2
        // Predicated region
        $region49: #{wtconv1d_forward.5} parent=47 // pred_check
          %p388 = pneg %p158
        $region50: #{wtconv1d_forward.5} parent=47 // pred_check_branch
          %390 = sbr.rel (%p388) target = $region52
        $region51: #{wtconv1d_forward.5} parent=47 // pred_region
          %s391 = sand.u32 %s143, 1
          %s392 = scalar_lea.sflag [#allocation4], %s391
          %s393 = sand.u32 %s143, 1
          %s394 = smul.addr %s393, 8
          %s395 = scalar_lea.vmem [#allocation3], %s394
          %396 = dma.done %s392, 128
        $region52: #{wtconv1d_forward.5} parent=47 // pred_fallthru
          _
      $region48: #{wtconv1d_forward.5} parent=5 // pred_fallthru
        _
    $region6: #{wtconv1d_forward.5} parent=1 // loop_footer
      %s18 = sadd.s32 1, %s14
    $region7: #{wtconv1d_forward.5} parent=1 // loop_footer_branch
      %13 = sbr.rel target = $region3
    $region8: #{wtconv1d_forward.5} parent=1 // loop_exit
      _
    %397 = vsyncpa [#allocation4], 1
    %s398 = scalar_lea.sflag [#allocation4], 1
    %399 = vsyncpa %s398, 1

</llo_original>
